<compile_context>
chip_gen: v7x
topology: tpu7x:2x2x1
jax: 0.10.0
libtpu: 0.0.40
codegen_flags: <defaults>
</compile_context>

<pallas_src>
import functools

import jax
import jax.numpy as jnp
from jax import lax
from jax.experimental import pallas as pl
from jax.experimental.pallas import tpu as pltpu


def _leaky_relu(z):
    return jnp.where(z >= 0, z, 0.01 * z)


def _round_up(x, m):
    return (x + m - 1) // m * m


# ----------------------------------------------------------------------------
# Kernel
# ----------------------------------------------------------------------------
def aae_kernel(x1_ref, x2_ref,
               we1_ref, be1_ref, we2_ref, be2_ref,
               wd_ref, bd_ref,
               y1_ref, y2_ref, bott_ref):
    cdt = we1_ref.dtype
    x1 = x1_ref[...].astype(cdt)          # in-kernel cast (no extra HBM pass)
    x2 = x2_ref[...].astype(cdt)

    # --- encoders (f32 accumulation regardless of operand dtype) -----------
    h1 = _leaky_relu(
        jnp.dot(x1, we1_ref[...], preferred_element_type=jnp.float32)
        + be1_ref[...])
    h2 = _leaky_relu(
        jnp.dot(x2, we2_ref[...], preferred_element_type=jnp.float32)
        + be2_ref[...])
    s = h1 + h2                            # f32, (bm, Lp)

    # --- bottleneck ---------------------------------------------------------
    # Original module: F.normalize((h1+h2) / ||h1+h2||_F, dim=1).  Row
    # normalization is scale invariant, so the global Frobenius-norm pass
    # cancels: bott = s / max(||s_row||, eps).  rsqrt lives on the EUP slot and
    # removing the all-batch reduction is what permits batch tiling.
    row_sq = jnp.sum(s * s, axis=1, keepdims=True)
    inv_norm = lax.rsqrt(jnp.maximum(row_sq, 1e-24))   # == 1/max(||s_row||,1e-12)
    bott = s * inv_norm
    bott_ref[...] = bott.astype(bott_ref.dtype)

    # --- fused decoders: wd = [wd1 | wd2] -> one (bm, 2D) MXU pass ----------
    y = _leaky_relu(
        jnp.dot(bott.astype(cdt), wd_ref[...],
                preferred_element_type=jnp.float32)
        + bd_ref[...])
    D = y1_ref.shape[1]
    y1_ref[...] = y[:, :D].astype(y1_ref.dtype)
    y2_ref[...] = y[:, D:].astype(y2_ref.dtype)


# ----------------------------------------------------------------------------
# One-time weight preparation (hoisted out of the per-forward hot path)
# ----------------------------------------------------------------------------
def prepare_aae_params(params, compute_dtype=jnp.float32):
    """Cast weights to the compute dtype, fuse the two decoders along the
    output axis, and pad the latent dim to a multiple of 128 (lane-dense)."""
    cdt = jnp.dtype(compute_dtype)
    D, L = params["we1"].shape
    Lp = _round_up(L, 128)
    padL = Lp - L

    def enc_w(w):                              # (D, L) -> (D, Lp)
        w = jnp.pad(w, ((0, 0), (0, padL))) if padL else w
        return w.astype(cdt)

    def enc_b(b):                              # (L,) -> (1, Lp), f32
        b = jnp.pad(b, (0, padL)) if padL else b
        return b.reshape(1, Lp).astype(jnp.float32)

    wd = jnp.concatenate([params["wd1"], params["wd2"]], axis=1)     # (L, 2D)
    if padL:
        wd = jnp.pad(wd, ((0, padL), (0, 0)))                        # (Lp, 2D)
    bd = jnp.concatenate([params["bd1"], params["bd2"]]).reshape(1, 2 * D)

    return {
        "we1": enc_w(params["we1"]), "be1": enc_b(params["be1"]),
        "we2": enc_w(params["we2"]), "be2": enc_b(params["be2"]),
        "wd": wd.astype(cdt), "bd": bd.astype(jnp.float32),
        "D": D, "L": L, "Lp": Lp, "compute_dtype": cdt,
    }


# ----------------------------------------------------------------------------
# Wrapper
# ----------------------------------------------------------------------------
def _vmem_capacity_bytes():
    try:
        info = pltpu.get_tpu_info()
        cap = getattr(info, "vmem_capacity_bytes", None)
        if cap:
            return int(cap)
    except Exception:
        pass
    return 64 * 2**20        # conservative: v7x has the smallest VMEM


def _vmem_estimate(bm, D, Lp, x_itm, w_itm, out_itm, weight_bufs):
    x_tiles = 2 * 2 * bm * D * x_itm                               # x1,x2, 2-deep
    weights = weight_bufs * ((2 * D * Lp + Lp * 2 * D) * w_itm
                             + (2 * Lp + 2 * D) * 4)               # resident weights/biases
    out_tiles = 2 * (2 * bm * D + bm * Lp) * out_itm               # y1,y2,bott, 2-deep
    interm = 6 * bm * max(Lp, 2 * D) * 4                           # f32 intermediates headroom
    return x_tiles + weights + out_tiles + interm


def aae_forward(x1, x2, prepped, *, block_batch=None):
    """AAE forward pass in one Pallas kernel, batch tiled over a 1-D grid.

    Weights stay VMEM-resident (single-buffered) across the grid; only
    activation tiles stream.  Output dtype follows the compute dtype."""
    B, D = x1.shape
    assert D == prepped["D"]
    L, Lp = prepped["L"], prepped["Lp"]
    cdt = prepped["compute_dtype"]
    out_dt = cdt                                   # bf16 path -> bf16 writeback
    x_itm = jnp.dtype(x1.dtype).itemsize
    w_itm = cdt.itemsize
    out_itm = jnp.dtype(out_dt).itemsize

    # Per-generation VMEM budget: 128 MiB parts (v5e/v6e) -> ~96 MiB,
    # 64 MiB parts (v7x) -> ~44 MiB.
    vmem_cap = _vmem_capacity_bytes()
    vmem_budget = 96 * 2**20 if vmem_cap >= 120 * 2**20 else 44 * 2**20

    # Sublane alignment for the narrowest dtype that sees a (bm, ...) block.
    min_sub = 16 if min(x_itm, out_itm) == 2 else 8

    est = functools.partial(_vmem_estimate, D=D, Lp=Lp, x_itm=x_itm,
                            w_itm=w_itm, out_itm=out_itm, weight_bufs=2)

    if block_batch is not None:
        bm = max(min_sub,
                 _round_up(min(block_batch, _round_up(B, min_sub)), min_sub))
    else:
        # Largest sublane-aligned tile <= 2048 (and <= B) that fits the budget.
        bm = max(min_sub, min(2048, _round_up(B, min_sub)))
        while bm > min_sub and est(bm) > vmem_budget:
            bm = max(min_sub, _round_up(bm // 2, min_sub))
        # Force >= 2 grid steps so the "parallel" batch axis can shard across
        # v7x's two TensorCores.
        if pl.cdiv(B, bm) < 2 and B > min_sub:
            bm = max(min_sub, _round_up(pl.cdiv(B, 2), min_sub))

    n_blocks = pl.cdiv(B, bm)
    vmem_limit = int(min(max(2 * est(bm), 16 * 2**20), vmem_budget))

    # Advisory cost estimate for XLA's scheduler.
    flops = 8 * B * D * Lp                          # 2 encoders + fused decoder
    bytes_accessed = (2 * B * D * x_itm
                      + 4 * D * Lp * w_itm + (2 * Lp + 2 * D) * 4
                      + (2 * B * D + B * Lp) * out_itm)
    cost = pl.CostEstimate(flops=int(flops), transcendentals=int(B),
                           bytes_accessed=int(bytes_accessed))

    stream = lambda shape: pl.BlockSpec(shape, lambda i: (i, 0))

    def build_and_call(single_buffer_weights):
        if single_buffer_weights:
            resident = lambda shape: pl.BlockSpec(
                shape, lambda i: (0, 0), pipeline_mode=pl.Buffered(1))
        else:
            resident = lambda shape: pl.BlockSpec(shape, lambda i: (0, 0))
        return pl.pallas_call(
            aae_kernel,
            grid=(n_blocks,),
            out_shape=(
                jax.ShapeDtypeStruct((B, D), out_dt),     # y1
                jax.ShapeDtypeStruct((B, D), out_dt),     # y2
                jax.ShapeDtypeStruct((B, Lp), out_dt),    # bottleneck (padded L)
            ),
            in_specs=[
                stream((bm, D)), stream((bm, D)),
                resident((D, Lp)), resident((1, Lp)),
                resident((D, Lp)), resident((1, Lp)),
                resident((Lp, 2 * D)), resident((1, 2 * D)),
            ],
            out_specs=(stream((bm, D)), stream((bm, D)), stream((bm, Lp))),
            compiler_params=pltpu.CompilerParams(
                dimension_semantics=("parallel",),
                vmem_limit_bytes=vmem_limit),
            cost_estimate=cost,
        )(x1, x2,
          prepped["we1"], prepped["be1"], prepped["we2"], prepped["be2"],
          prepped["wd"], prepped["bd"])

    # Resident weights only need one VMEM buffer (constant index_map); fall
    # back to default double buffering if this build rejects Buffered(1).
    try:
        y1, y2, bott = build_and_call(True)
    except Exception:
        y1, y2, bott = build_and_call(False)

    if Lp != L:
        bott = bott[:, :L]
    return [y1, y2], bott


# ----------------------------------------------------------------------------
# Parameter init (mirrors the PyTorch module: weights ~ N(0, 0.01), biases 0;
# weights stored pre-transposed as (in, out))
# ----------------------------------------------------------------------------
def init_params(key, input_dim, latent_dim):
    k1, k2, k3, k4 = jax.random.split(key, 4)
    n = lambda k, shp: (0.01 * jax.random.normal(k, shp)).astype(jnp.float32)
    return {
        "we1": n(k1, (input_dim, latent_dim)),
        "be1": jnp.zeros((latent_dim,), jnp.float32),
        "we2": n(k2, (input_dim, latent_dim)),
        "be2": jnp.zeros((latent_dim,), jnp.float32),
        "wd1": n(k3, (latent_dim, input_dim)),
        "bd1": jnp.zeros((input_dim,), jnp.float32),
        "wd2": n(k4, (latent_dim, input_dim)),
        "bd2": jnp.zeros((input_dim,), jnp.float32),
    }


if __name__ == "__main__":
    key = jax.random.PRNGKey(0)
    kx1, kx2, kp = jax.random.split(key, 3)

    # Exercises: latent padding 64 -> 128, partial tail block, 2-step grid.
    batch, input_dim, latent_dim = 30, 128, 64
    x1 = jax.random.normal(kx1, (batch, input_dim), dtype=jnp.float32)
    x2 = jax.random.normal(kx2, (batch, input_dim), dtype=jnp.float32)
    params = init_params(kp, input_dim, latent_dim)

    # Pure-JAX reference of the ORIGINAL formulation (global Frobenius norm,
    # then row-wise F.normalize) -- validates the algebraic simplification.
    act = lambda z: jnp.where(z >= 0, z, 0.01 * z)
    h1 = act(x1 @ params["we1"] + params["be1"])
    h2 = act(x2 @ params["we2"] + params["be2"])
    s = h1 + h2
    b = s / jnp.sqrt(jnp.sum(s * s))
    bott_ref = b / jnp.maximum(
        jnp.sqrt(jnp.sum(b * b, axis=1, keepdims=True)), 1e-12)
    y1_ref = act(bott_ref @ params["wd1"] + params["bd1"])
    y2_ref = act(bott_ref @ params["wd2"] + params["bd2"])

    # f32 path (weights prepared once, reusable across forwards).
    prepped_f32 = prepare_aae_params(params, jnp.float32)
    (y1, y2), bott = aae_forward(x1, x2, prepped_f32)
    jax.block_until_ready((y1, y2, bott))
    assert jnp.allclose(bott, bott_ref, rtol=1e-3, atol=1e-5)
    assert jnp.allclose(y1, y1_ref, rtol=1e-3, atol=1e-5)
    assert jnp.allclose(y2, y2_ref, rtol=1e-3, atol=1e-5)

    # bf16 path: bf16 weights / MXU operands / outputs, f32 accumulation and
    # normalization math (memory-bound win on v5e/v6e/v7x).
    prepped_bf16 = prepare_aae_params(params, jnp.bfloat16)
    (y1b, y2b), bott_b = aae_forward(x1, x2, prepped_bf16)
    jax.block_until_ready((y1b, y2b, bott_b))
    assert jnp.allclose(bott_b.astype(jnp.float32), bott_ref, atol=5e-2)
    assert jnp.allclose(y1b.astype(jnp.float32), y1_ref, atol=5e-2)
    assert jnp.allclose(y2b.astype(jnp.float32), y2_ref, atol=5e-2)

    print("KERNEL_OK")
</pallas_src>

<mosaic_0001>
module attributes {stable_mosaic.version = 11 : i64} {
  func.func @aae_kernel(%arg0: i32, %arg1: memref<16x128xf32, #tpu.memory_space<vmem>>, %arg2: memref<16x128xf32, #tpu.memory_space<vmem>>, %arg3: memref<128x128xf32, #tpu.memory_space<vmem>>, %arg4: memref<1x128xf32, #tpu.memory_space<vmem>>, %arg5: memref<128x128xf32, #tpu.memory_space<vmem>>, %arg6: memref<1x128xf32, #tpu.memory_space<vmem>>, %arg7: memref<128x256xf32, #tpu.memory_space<vmem>>, %arg8: memref<1x256xf32, #tpu.memory_space<vmem>>, %arg9: memref<16x128xf32, #tpu.memory_space<vmem>>, %arg10: memref<16x128xf32, #tpu.memory_space<vmem>>, %arg11: memref<16x128xf32, #tpu.memory_space<vmem>>) attributes {dimension_semantics = [#tpu.dimension_semantics<parallel>], iteration_bounds = array<i64: 2>, scalar_prefetch = 0 : i64, scratch_operands = 0 : i64, tpu.core_type = #tpu.core_type<tc>, window_params = [{transform_indices = @transform_0, window_bounds = array<i64: 16, 128>}, {transform_indices = @transform_1, window_bounds = array<i64: 16, 128>}, {pipeline_mode = #tpu.pipeline_mode<synchronous>, transform_indices = @transform_2, window_bounds = array<i64: 128, 128>}, {pipeline_mode = #tpu.pipeline_mode<synchronous>, transform_indices = @transform_3, window_bounds = array<i64: 1, 128>}, {pipeline_mode = #tpu.pipeline_mode<synchronous>, transform_indices = @transform_4, window_bounds = array<i64: 128, 128>}, {pipeline_mode = #tpu.pipeline_mode<synchronous>, transform_indices = @transform_5, window_bounds = array<i64: 1, 128>}, {pipeline_mode = #tpu.pipeline_mode<synchronous>, transform_indices = @transform_6, window_bounds = array<i64: 128, 256>}, {pipeline_mode = #tpu.pipeline_mode<synchronous>, transform_indices = @transform_7, window_bounds = array<i64: 1, 256>}, {transform_indices = @transform_8, window_bounds = array<i64: 16, 128>}, {transform_indices = @transform_9, window_bounds = array<i64: 16, 128>}, {transform_indices = @transform_10, window_bounds = array<i64: 16, 128>}]} {
    %c0 = arith.constant 0 : index
    %c0_0 = arith.constant 0 : index
    %0 = vector.load %arg1[%c0, %c0_0] : memref<16x128xf32, #tpu.memory_space<vmem>>, vector<16x128xf32>
    %c0_1 = arith.constant 0 : index
    %c0_2 = arith.constant 0 : index
    %1 = vector.load %arg2[%c0_1, %c0_2] : memref<16x128xf32, #tpu.memory_space<vmem>>, vector<16x128xf32>
    %c0_3 = arith.constant 0 : index
    %c0_4 = arith.constant 0 : index
    %2 = vector.load %arg3[%c0_3, %c0_4] : memref<128x128xf32, #tpu.memory_space<vmem>>, vector<128x128xf32>
    %cst = arith.constant dense<0.000000e+00> : vector<16x128xf32>
    %3 = tpu.matmul %0, %2, %cst {dimension_numbers = #tpu.dot_dimension_numbers<[1], [0], [0], [1], [0, 0, 1, 1], [], []>} : vector<16x128xf32>, vector<128x128xf32>, vector<16x128xf32> -> vector<16x128xf32>
    %c0_5 = arith.constant 0 : index
    %c0_6 = arith.constant 0 : index
    %4 = vector.load %arg4[%c0_5, %c0_6] : memref<1x128xf32, #tpu.memory_space<vmem>>, vector<1x128xf32>
    %5 = vector.broadcast %4 : vector<1x128xf32> to vector<16x128xf32>
    %6 = arith.addf %3, %5 : vector<16x128xf32>
    %cst_7 = arith.constant 0.000000e+00 : f32
    %7 = vector.broadcast %cst_7 : f32 to vector<16x128xf32>
    %8 = arith.cmpf oge, %6, %7 : vector<16x128xf32>
    %cst_8 = arith.constant 0.00999999977 : f32
    %9 = vector.broadcast %cst_8 : f32 to vector<16x128xf32>
    %10 = arith.mulf %9, %6 : vector<16x128xf32>
    %11 = arith.select %8, %6, %10 : vector<16x128xi1>, vector<16x128xf32>
    %c0_9 = arith.constant 0 : index
    %c0_10 = arith.constant 0 : index
    %12 = vector.load %arg5[%c0_9, %c0_10] : memref<128x128xf32, #tpu.memory_space<vmem>>, vector<128x128xf32>
    %cst_11 = arith.constant dense<0.000000e+00> : vector<16x128xf32>
    %13 = tpu.matmul %1, %12, %cst_11 {dimension_numbers = #tpu.dot_dimension_numbers<[1], [0], [0], [1], [0, 0, 1, 1], [], []>} : vector<16x128xf32>, vector<128x128xf32>, vector<16x128xf32> -> vector<16x128xf32>
    %c0_12 = arith.constant 0 : index
    %c0_13 = arith.constant 0 : index
    %14 = vector.load %arg6[%c0_12, %c0_13] : memref<1x128xf32, #tpu.memory_space<vmem>>, vector<1x128xf32>
    %15 = vector.broadcast %14 : vector<1x128xf32> to vector<16x128xf32>
    %16 = arith.addf %13, %15 : vector<16x128xf32>
    %cst_14 = arith.constant 0.000000e+00 : f32
    %17 = vector.broadcast %cst_14 : f32 to vector<16x128xf32>
    %18 = arith.cmpf oge, %16, %17 : vector<16x128xf32>
    %cst_15 = arith.constant 0.00999999977 : f32
    %19 = vector.broadcast %cst_15 : f32 to vector<16x128xf32>
    %20 = arith.mulf %19, %16 : vector<16x128xf32>
    %21 = arith.select %18, %16, %20 : vector<16x128xi1>, vector<16x128xf32>
    %22 = arith.addf %11, %21 : vector<16x128xf32>
    %23 = arith.mulf %22, %22 : vector<16x128xf32>
    %cst_16 = arith.constant dense<0.000000e+00> : vector<16xf32>
    %24 = vector.multi_reduction <add>, %23, %cst_16 [1] : vector<16x128xf32> to vector<16xf32>
    %25 = vector.shape_cast %24 : vector<16xf32> to vector<16x1xf32>
    %cst_17 = arith.constant 1.000000e-24 : f32
    %26 = vector.broadcast %cst_17 : f32 to vector<16x1xf32>
    %27 = arith.maximumf %25, %26 : vector<16x1xf32>
    %28 = math.rsqrt %27 : vector<16x1xf32>
    %29 = vector.broadcast %28 : vector<16x1xf32> to vector<16x128xf32>
    %30 = arith.mulf %22, %29 : vector<16x128xf32>
    %c0_18 = arith.constant 0 : index
    %c0_19 = arith.constant 0 : index
    %31 = vector.load %arg11[%c0_18, %c0_19] : memref<16x128xf32, #tpu.memory_space<vmem>>, vector<16x128xf32>
    tpu.vector_store %arg11[%c0_18, %c0_19], %30 {strides = array<i32>} : memref<16x128xf32, #tpu.memory_space<vmem>>, vector<16x128xf32>,
    %c0_20 = arith.constant 0 : index
    %c0_21 = arith.constant 0 : index
    %32 = vector.load %arg7[%c0_20, %c0_21] : memref<128x256xf32, #tpu.memory_space<vmem>>, vector<128x256xf32>
    %cst_22 = arith.constant dense<0.000000e+00> : vector<16x256xf32>
    %33 = tpu.matmul %30, %32, %cst_22 {dimension_numbers = #tpu.dot_dimension_numbers<[1], [0], [0], [1], [0, 0, 1, 1], [], []>} : vector<16x128xf32>, vector<128x256xf32>, vector<16x256xf32> -> vector<16x256xf32>
    %c0_23 = arith.constant 0 : index
    %c0_24 = arith.constant 0 : index
    %34 = vector.load %arg8[%c0_23, %c0_24] : memref<1x256xf32, #tpu.memory_space<vmem>>, vector<1x256xf32>
    %35 = vector.broadcast %34 : vector<1x256xf32> to vector<16x256xf32>
    %36 = arith.addf %33, %35 : vector<16x256xf32>
    %cst_25 = arith.constant 0.000000e+00 : f32
    %37 = vector.broadcast %cst_25 : f32 to vector<16x256xf32>
    %38 = arith.cmpf oge, %36, %37 : vector<16x256xf32>
    %cst_26 = arith.constant 0.00999999977 : f32
    %39 = vector.broadcast %cst_26 : f32 to vector<16x256xf32>
    %40 = arith.mulf %39, %36 : vector<16x256xf32>
    %41 = arith.select %38, %36, %40 : vector<16x256xi1>, vector<16x256xf32>
    %42 = vector.extract_strided_slice %41 {offsets = [0, 0], sizes = [16, 128], strides = [1, 1]} : vector<16x256xf32> to vector<16x128xf32>
    %c0_27 = arith.constant 0 : index
    %c0_28 = arith.constant 0 : index
    %43 = vector.load %arg9[%c0_27, %c0_28] : memref<16x128xf32, #tpu.memory_space<vmem>>, vector<16x128xf32>
    tpu.vector_store %arg9[%c0_27, %c0_28], %42 {strides = array<i32>} : memref<16x128xf32, #tpu.memory_space<vmem>>, vector<16x128xf32>,
    %44 = vector.extract_strided_slice %41 {offsets = [0, 128], sizes = [16, 128], strides = [1, 1]} : vector<16x256xf32> to vector<16x128xf32>
    %c0_29 = arith.constant 0 : index
    %c0_30 = arith.constant 0 : index
    %45 = vector.load %arg10[%c0_29, %c0_30] : memref<16x128xf32, #tpu.memory_space<vmem>>, vector<16x128xf32>
    tpu.vector_store %arg10[%c0_29, %c0_30], %44 {strides = array<i32>} : memref<16x128xf32, #tpu.memory_space<vmem>>, vector<16x128xf32>,
    return
  }
  func.func @transform_0(%arg0: i32) -> (i32, i32) {
    %c0_i32 = arith.constant 0 : i32
    %c0_i32_0 = arith.constant 0 : i32
    return %arg0, %c0_i32 : i32, i32
  }
  func.func @transform_1(%arg0: i32) -> (i32, i32) {
    %c0_i32 = arith.constant 0 : i32
    %c0_i32_0 = arith.constant 0 : i32
    return %arg0, %c0_i32 : i32, i32
  }
  func.func @transform_2(%arg0: i32) -> (i32, i32) {
    %c0_i32 = arith.constant 0 : i32
    %c0_i32_0 = arith.constant 0 : i32
    %c0_i32_1 = arith.constant 0 : i32
    return %c0_i32, %c0_i32_0 : i32, i32
  }
  func.func @transform_3(%arg0: i32) -> (i32, i32) {
    %c0_i32 = arith.constant 0 : i32
    %c0_i32_0 = arith.constant 0 : i32
    %c0_i32_1 = arith.constant 0 : i32
    return %c0_i32, %c0_i32_0 : i32, i32
  }
  func.func @transform_4(%arg0: i32) -> (i32, i32) {
    %c0_i32 = arith.constant 0 : i32
    %c0_i32_0 = arith.constant 0 : i32
    %c0_i32_1 = arith.constant 0 : i32
    return %c0_i32, %c0_i32_0 : i32, i32
  }
  func.func @transform_5(%arg0: i32) -> (i32, i32) {
    %c0_i32 = arith.constant 0 : i32
    %c0_i32_0 = arith.constant 0 : i32
    %c0_i32_1 = arith.constant 0 : i32
    return %c0_i32, %c0_i32_0 : i32, i32
  }
  func.func @transform_6(%arg0: i32) -> (i32, i32) {
    %c0_i32 = arith.constant 0 : i32
    %c0_i32_0 = arith.constant 0 : i32
    %c0_i32_1 = arith.constant 0 : i32
    return %c0_i32, %c0_i32_0 : i32, i32
  }
  func.func @transform_7(%arg0: i32) -> (i32, i32) {
    %c0_i32 = arith.constant 0 : i32
    %c0_i32_0 = arith.constant 0 : i32
    %c0_i32_1 = arith.constant 0 : i32
    return %c0_i32, %c0_i32_0 : i32, i32
  }
  func.func @transform_8(%arg0: i32) -> (i32, i32) {
    %c0_i32 = arith.constant 0 : i32
    %c0_i32_0 = arith.constant 0 : i32
    return %arg0, %c0_i32 : i32, i32
  }
  func.func @transform_9(%arg0: i32) -> (i32, i32) {
    %c0_i32 = arith.constant 0 : i32
    %c0_i32_0 = arith.constant 0 : i32
    return %arg0, %c0_i32 : i32, i32
  }
  func.func @transform_10(%arg0: i32) -> (i32, i32) {
    %c0_i32 = arith.constant 0 : i32
    %c0_i32_0 = arith.constant 0 : i32
    return %arg0, %c0_i32 : i32, i32
  }
}

module attributes {stable_mosaic.version = 11 : i64} {
  func.func @aae_kernel(%arg0: i32, %arg1: memref<16x128xf32, #tpu.memory_space<vmem>>, %arg2: memref<16x128xf32, #tpu.memory_space<vmem>>, %arg3: memref<128x128xf32, #tpu.memory_space<vmem>>, %arg4: memref<1x128xf32, #tpu.memory_space<vmem>>, %arg5: memref<128x128xf32, #tpu.memory_space<vmem>>, %arg6: memref<1x128xf32, #tpu.memory_space<vmem>>, %arg7: memref<128x256xf32, #tpu.memory_space<vmem>>, %arg8: memref<1x256xf32, #tpu.memory_space<vmem>>, %arg9: memref<16x128xf32, #tpu.memory_space<vmem>>, %arg10: memref<16x128xf32, #tpu.memory_space<vmem>>, %arg11: memref<16x128xf32, #tpu.memory_space<vmem>>) attributes {dimension_semantics = [#tpu.dimension_semantics<parallel>], iteration_bounds = array<i64: 2>, scalar_prefetch = 0 : i64, scratch_operands = 0 : i64, tpu.core_type = #tpu.core_type<tc>, window_params = [{transform_indices = @transform_0, window_bounds = array<i64: 16, 128>}, {transform_indices = @transform_1, window_bounds = array<i64: 16, 128>}, {pipeline_mode = #tpu.pipeline_mode<synchronous>, transform_indices = @transform_2, window_bounds = array<i64: 128, 128>}, {pipeline_mode = #tpu.pipeline_mode<synchronous>, transform_indices = @transform_3, window_bounds = array<i64: 1, 128>}, {pipeline_mode = #tpu.pipeline_mode<synchronous>, transform_indices = @transform_4, window_bounds = array<i64: 128, 128>}, {pipeline_mode = #tpu.pipeline_mode<synchronous>, transform_indices = @transform_5, window_bounds = array<i64: 1, 128>}, {pipeline_mode = #tpu.pipeline_mode<synchronous>, transform_indices = @transform_6, window_bounds = array<i64: 128, 256>}, {pipeline_mode = #tpu.pipeline_mode<synchronous>, transform_indices = @transform_7, window_bounds = array<i64: 1, 256>}, {transform_indices = @transform_8, window_bounds = array<i64: 16, 128>}, {transform_indices = @transform_9, window_bounds = array<i64: 16, 128>}, {transform_indices = @transform_10, window_bounds = array<i64: 16, 128>}]} {
    %c0 = arith.constant 0 : index
    %c0_0 = arith.constant 0 : index
    %0 = vector.load %arg1[%c0, %c0_0] : memref<16x128xf32, #tpu.memory_space<vmem>>, vector<16x128xf32>
    %c0_1 = arith.constant 0 : index
    %c0_2 = arith.constant 0 : index
    %1 = vector.load %arg2[%c0_1, %c0_2] : memref<16x128xf32, #tpu.memory_space<vmem>>, vector<16x128xf32>
    %c0_3 = arith.constant 0 : index
    %c0_4 = arith.constant 0 : index
    %2 = vector.load %arg3[%c0_3, %c0_4] : memref<128x128xf32, #tpu.memory_space<vmem>>, vector<128x128xf32>
    %cst = arith.constant dense<0.000000e+00> : vector<16x128xf32>
    %3 = tpu.matmul %0, %2, %cst {dimension_numbers = #tpu.dot_dimension_numbers<[1], [0], [0], [1], [0, 0, 1, 1], [], []>} : vector<16x128xf32>, vector<128x128xf32>, vector<16x128xf32> -> vector<16x128xf32>
    %c0_5 = arith.constant 0 : index
    %c0_6 = arith.constant 0 : index
    %4 = vector.load %arg4[%c0_5, %c0_6] : memref<1x128xf32, #tpu.memory_space<vmem>>, vector<1x128xf32>
    %5 = vector.broadcast %4 : vector<1x128xf32> to vector<16x128xf32>
    %6 = arith.addf %3, %5 : vector<16x128xf32>
    %cst_7 = arith.constant 0.000000e+00 : f32
    %7 = vector.broadcast %cst_7 : f32 to vector<16x128xf32>
    %8 = arith.cmpf oge, %6, %7 : vector<16x128xf32>
    %cst_8 = arith.constant 0.00999999977 : f32
    %9 = vector.broadcast %cst_8 : f32 to vector<16x128xf32>
    %10 = arith.mulf %9, %6 : vector<16x128xf32>
    %11 = arith.select %8, %6, %10 : vector<16x128xi1>, vector<16x128xf32>
    %c0_9 = arith.constant 0 : index
    %c0_10 = arith.constant 0 : index
    %12 = vector.load %arg5[%c0_9, %c0_10] : memref<128x128xf32, #tpu.memory_space<vmem>>, vector<128x128xf32>
    %cst_11 = arith.constant dense<0.000000e+00> : vector<16x128xf32>
    %13 = tpu.matmul %1, %12, %cst_11 {dimension_numbers = #tpu.dot_dimension_numbers<[1], [0], [0], [1], [0, 0, 1, 1], [], []>} : vector<16x128xf32>, vector<128x128xf32>, vector<16x128xf32> -> vector<16x128xf32>
    %c0_12 = arith.constant 0 : index
    %c0_13 = arith.constant 0 : index
    %14 = vector.load %arg6[%c0_12, %c0_13] : memref<1x128xf32, #tpu.memory_space<vmem>>, vector<1x128xf32>
    %15 = vector.broadcast %14 : vector<1x128xf32> to vector<16x128xf32>
    %16 = arith.addf %13, %15 : vector<16x128xf32>
    %cst_14 = arith.constant 0.000000e+00 : f32
    %17 = vector.broadcast %cst_14 : f32 to vector<16x128xf32>
    %18 = arith.cmpf oge, %16, %17 : vector<16x128xf32>
    %cst_15 = arith.constant 0.00999999977 : f32
    %19 = vector.broadcast %cst_15 : f32 to vector<16x128xf32>
    %20 = arith.mulf %19, %16 : vector<16x128xf32>
    %21 = arith.select %18, %16, %20 : vector<16x128xi1>, vector<16x128xf32>
    %22 = arith.addf %11, %21 : vector<16x128xf32>
    %23 = arith.mulf %22, %22 : vector<16x128xf32>
    %cst_16 = arith.constant dense<0.000000e+00> : vector<16xf32>
    %24 = vector.multi_reduction <add>, %23, %cst_16 [1] : vector<16x128xf32> to vector<16xf32>
    %25 = vector.shape_cast %24 : vector<16xf32> to vector<16x1xf32>
    %cst_17 = arith.constant 1.000000e-24 : f32
    %26 = vector.broadcast %cst_17 : f32 to vector<16x1xf32>
    %27 = arith.maximumf %25, %26 : vector<16x1xf32>
    %28 = math.rsqrt %27 : vector<16x1xf32>
    %29 = vector.broadcast %28 : vector<16x1xf32> to vector<16x128xf32>
    %30 = arith.mulf %22, %29 : vector<16x128xf32>
    %c0_18 = arith.constant 0 : index
    %c0_19 = arith.constant 0 : index
    %31 = vector.load %arg11[%c0_18, %c0_19] : memref<16x128xf32, #tpu.memory_space<vmem>>, vector<16x128xf32>
    tpu.vector_store %arg11[%c0_18, %c0_19], %30 {strides = array<i32>} : memref<16x128xf32, #tpu.memory_space<vmem>>, vector<16x128xf32>,
    %c0_20 = arith.constant 0 : index
    %c0_21 = arith.constant 0 : index
    %32 = vector.load %arg7[%c0_20, %c0_21] : memref<128x256xf32, #tpu.memory_space<vmem>>, vector<128x256xf32>
    %cst_22 = arith.constant dense<0.000000e+00> : vector<16x256xf32>
    %33 = tpu.matmul %30, %32, %cst_22 {dimension_numbers = #tpu.dot_dimension_numbers<[1], [0], [0], [1], [0, 0, 1, 1], [], []>} : vector<16x128xf32>, vector<128x256xf32>, vector<16x256xf32> -> vector<16x256xf32>
    %c0_23 = arith.constant 0 : index
    %c0_24 = arith.constant 0 : index
    %34 = vector.load %arg8[%c0_23, %c0_24] : memref<1x256xf32, #tpu.memory_space<vmem>>, vector<1x256xf32>
    %35 = vector.broadcast %34 : vector<1x256xf32> to vector<16x256xf32>
    %36 = arith.addf %33, %35 : vector<16x256xf32>
    %cst_25 = arith.constant 0.000000e+00 : f32
    %37 = vector.broadcast %cst_25 : f32 to vector<16x256xf32>
    %38 = arith.cmpf oge, %36, %37 : vector<16x256xf32>
    %cst_26 = arith.constant 0.00999999977 : f32
    %39 = vector.broadcast %cst_26 : f32 to vector<16x256xf32>
    %40 = arith.mulf %39, %36 : vector<16x256xf32>
    %41 = arith.select %38, %36, %40 : vector<16x256xi1>, vector<16x256xf32>
    %42 = vector.extract_strided_slice %41 {offsets = [0, 0], sizes = [16, 128], strides = [1, 1]} : vector<16x256xf32> to vector<16x128xf32>
    %c0_27 = arith.constant 0 : index
    %c0_28 = arith.constant 0 : index
    %43 = vector.load %arg9[%c0_27, %c0_28] : memref<16x128xf32, #tpu.memory_space<vmem>>, vector<16x128xf32>
    tpu.vector_store %arg9[%c0_27, %c0_28], %42 {strides = array<i32>} : memref<16x128xf32, #tpu.memory_space<vmem>>, vector<16x128xf32>,
    %44 = vector.extract_strided_slice %41 {offsets = [0, 128], sizes = [16, 128], strides = [1, 1]} : vector<16x256xf32> to vector<16x128xf32>
    %c0_29 = arith.constant 0 : index
    %c0_30 = arith.constant 0 : index
    %45 = vector.load %arg10[%c0_29, %c0_30] : memref<16x128xf32, #tpu.memory_space<vmem>>, vector<16x128xf32>
    tpu.vector_store %arg10[%c0_29, %c0_30], %44 {strides = array<i32>} : memref<16x128xf32, #tpu.memory_space<vmem>>, vector<16x128xf32>,
    return
  }
  func.func @transform_0(%arg0: i32) -> (i32, i32) {
    %c0_i32 = arith.constant 0 : i32
    %c0_i32_0 = arith.constant 0 : i32
    return %arg0, %c0_i32 : i32, i32
  }
  func.func @transform_1(%arg0: i32) -> (i32, i32) {
    %c0_i32 = arith.constant 0 : i32
    %c0_i32_0 = arith.constant 0 : i32
    return %arg0, %c0_i32 : i32, i32
  }
  func.func @transform_2(%arg0: i32) -> (i32, i32) {
    %c0_i32 = arith.constant 0 : i32
    %c0_i32_0 = arith.constant 0 : i32
    %c0_i32_1 = arith.constant 0 : i32
    return %c0_i32, %c0_i32_0 : i32, i32
  }
  func.func @transform_3(%arg0: i32) -> (i32, i32) {
    %c0_i32 = arith.constant 0 : i32
    %c0_i32_0 = arith.constant 0 : i32
    %c0_i32_1 = arith.constant 0 : i32
    return %c0_i32, %c0_i32_0 : i32, i32
  }
  func.func @transform_4(%arg0: i32) -> (i32, i32) {
    %c0_i32 = arith.constant 0 : i32
    %c0_i32_0 = arith.constant 0 : i32
    %c0_i32_1 = arith.constant 0 : i32
    return %c0_i32, %c0_i32_0 : i32, i32
  }
  func.func @transform_5(%arg0: i32) -> (i32, i32) {
    %c0_i32 = arith.constant 0 : i32
    %c0_i32_0 = arith.constant 0 : i32
    %c0_i32_1 = arith.constant 0 : i32
    return %c0_i32, %c0_i32_0 : i32, i32
  }
  func.func @transform_6(%arg0: i32) -> (i32, i32) {
    %c0_i32 = arith.constant 0 : i32
    %c0_i32_0 = arith.constant 0 : i32
    %c0_i32_1 = arith.constant 0 : i32
    return %c0_i32, %c0_i32_0 : i32, i32
  }
  func.func @transform_7(%arg0: i32) -> (i32, i32) {
    %c0_i32 = arith.constant 0 : i32
    %c0_i32_0 = arith.constant 0 : i32
    %c0_i32_1 = arith.constant 0 : i32
    return %c0_i32, %c0_i32_0 : i32, i32
  }
  func.func @transform_8(%arg0: i32) -> (i32, i32) {
    %c0_i32 = arith.constant 0 : i32
    %c0_i32_0 = arith.constant 0 : i32
    return %arg0, %c0_i32 : i32, i32
  }
  func.func @transform_9(%arg0: i32) -> (i32, i32) {
    %c0_i32 = arith.constant 0 : i32
    %c0_i32_0 = arith.constant 0 : i32
    return %arg0, %c0_i32 : i32, i32
  }
  func.func @transform_10(%arg0: i32) -> (i32, i32) {
    %c0_i32 = arith.constant 0 : i32
    %c0_i32_0 = arith.constant 0 : i32
    return %arg0, %c0_i32 : i32, i32
  }
}

</mosaic_0001>

<llo_original>
// kernel: tpu_custom_call.1
$region0: #{tpu_custom_call.1}
  #allocation0 [shape = 'u32[]', space=smem, size = 0x4, offset = 0x4, fixed_abs, tag = 'smem constant byte address 0x4 - core index']
  #allocation1 [shape = 'u32[144,128]{1,0:T(1,128)}', space=vmem, size = 0x12000, scoped, tag = 'internal scratch']
  %s0 = inlined_call_operand.hbm [shape: f32[30,128], index: 0, kind: input, shape index: {}]
  %s1 = inlined_call_operand.hbm [shape: f32[30,128], index: 1, kind: input, shape index: {}]
  %s2 = inlined_call_operand.hbm [shape: f32[128,128], index: 2, kind: input, shape index: {}]
  %s3 = inlined_call_operand.vmem [shape: f32[1,128], index: 3, kind: input, shape index: {}]
  %s4 = inlined_call_operand.hbm [shape: f32[128,128], index: 4, kind: input, shape index: {}]
  %s5 = inlined_call_operand.vmem [shape: f32[1,128], index: 5, kind: input, shape index: {}]
  %s6 = inlined_call_operand.hbm [shape: f32[128,256], index: 6, kind: input, shape index: {}]
  %s7 = inlined_call_operand.vmem [shape: f32[1,256], index: 7, kind: input, shape index: {}]
  %s8 = inlined_call_operand.hbm [shape: f32[30,128], index: 8, kind: output, shape index: {0}]
  %s9 = inlined_call_operand.hbm [shape: f32[30,128], index: 9, kind: output, shape index: {1}]
  %s10 = inlined_call_operand.hbm [shape: f32[30,128], index: 10, kind: output, shape index: {2}]
  %11 = xla_tuple %s8, %s9, %s10
  %s12 = sld [smem:[#allocation0]]
  $region101: #{tpu_custom_call.1} parent=0
    _
  %s14 = ssub.s32 1, %s12
  %s15 = scalar_select 0, %s14, %s12
  $region1: #{tpu_custom_call.1} parent=0
    #allocation2 [shape = 'u8[16384]{0}', space=vmem, size = 0x4000, scoped, tag = 'input window, operand 0']
    #allocation3 [shape = 's32[2]{0}', space=sflag, size = 0x8, scoped, tag = 'scoped memory for tpu_custom_call.1']
    #allocation4 [shape = 's32[2]{0}', space=sflag, size = 0x8, scoped, tag = 'scoped memory for tpu_custom_call.1']
    #allocation5 [shape = 'u8[16384]{0}', space=vmem, size = 0x4000, scoped, tag = 'input window, operand 1']
    #allocation6 [shape = 's32[2]{0}', space=sflag, size = 0x8, scoped, tag = 'scoped memory for tpu_custom_call.1']
    #allocation7 [shape = 'u8[65536]{0}', space=vmem, size = 0x10000, scoped, tag = 'input window, operand 2, single buffered']
    #allocation8 [shape = 'u8[65536]{0}', space=vmem, size = 0x10000, scoped, tag = 'input window, operand 4, single buffered']
    #allocation9 [shape = 's32[1]{0}', space=sflag, size = 0x4, scoped, tag = 'scoped memory for tpu_custom_call.1']
    #allocation10 [shape = 'u8[131072]{0}', space=vmem, size = 0x20000, scoped, tag = 'input window, operand 6, single buffered']
    #allocation11 [shape = 'u8[16384]{0}', space=vmem, size = 0x4000, scoped, tag = 'output window, operand 0']
    #allocation12 [shape = 'u8[16384]{0}', space=vmem, size = 0x4000, scoped, tag = 'output window, operand 1']
    #allocation13 [shape = 's32[2]{0}', space=sflag, size = 0x8, scoped, tag = 'scoped memory for tpu_custom_call.1']
    #allocation14 [shape = 'u8[16384]{0}', space=vmem, size = 0x4000, scoped, tag = 'output window, operand 2']
    %16 = vsyncpa [#allocation3], 0
    %s17 = scalar_lea.sflag [#allocation3], 1
    %18 = vsyncpa %s17, 0
    %19 = vsyncpa [#allocation6], 0
    %s20 = scalar_lea.sflag [#allocation6], 1
    %21 = vsyncpa %s20, 0
    %22 = vsyncpa [#allocation9], 0
    %23 = vsyncpa [#allocation4], 0
    %s24 = scalar_lea.sflag [#allocation4], 1
    %25 = vsyncpa %s24, 0
    %26 = vsyncpa [#allocation13], 0
    %s27 = scalar_lea.sflag [#allocation13], 1
    %28 = vsyncpa %s27, 0
    loop: start=0, step=1, limit=4
    $region2: #{tpu_custom_call.1} parent=1 // loop_pre_header
      _
    $region3: #{tpu_custom_call.1} parent=1 // loop_header
      %s30 = sphi 0, %s34
      %p31 = scmp.ge.s32.totalorder %s30, 4
      %s40 = sphi 0, %s42
      %s43 = sphi 0, %s40
      %s44 = sphi 0, %s43
      %s60 = sphi 0, %s44
      %s66 = sphi 0, %s68
      %s69 = sphi 0, %s66
      %s70 = sphi 0, %s69
      %s86 = sphi 0, %s70
      %s90 = sphi 0, %s90
      %s92 = sphi 0, %s90
      %s93 = sphi 0, %s92
      %s107 = sphi 0, %s93
      %s111 = sphi 0, %s111
      %s113 = sphi 0, %s111
      %s114 = sphi 0, %s113
      %s128 = sphi 0, %s114
      %s132 = sphi 0, %s132
      %s134 = sphi 0, %s132
      %s135 = sphi 0, %s134
      %s149 = sphi 0, %s135
      %s153 = sphi 0, %s153
      %s155 = sphi 0, %s153
      %s156 = sphi 0, %s155
      %s170 = sphi 0, %s156
      %s174 = sphi 0, %s174
      %s176 = sphi 0, %s174
      %s177 = sphi 0, %s176
      %s191 = sphi 0, %s177
      %s195 = sphi 0, %s195
      %s197 = sphi 0, %s195
      %s198 = sphi 0, %s197
      %s212 = sphi 0, %s198
      %s218 = sphi 0, %s220
      %s221 = sphi 0, %s218
      %s222 = sphi 0, %s221
      %s238 = sphi 0, %s222
      %s244 = sphi 0, %s246
      %s247 = sphi 0, %s244
      %s248 = sphi 0, %s247
      %s264 = sphi 0, %s248
      %s270 = sphi 0, %s272
      %s273 = sphi 0, %s270
      %s274 = sphi 0, %s273
      %s290 = sphi 0, %s274
    $region4: #{tpu_custom_call.1} parent=1 // loop_header_branch
      %33 = sbr.rel (%p31) target = $region8
    $region5: #{tpu_custom_call.1} parent=1 // loop_body
      %s35 = ssub.s32 %s30, 1
      %s36 = ssub.s32 %s30, 2
      %s37 = sadd.s32 %s30, 1
      %s38 = ssub.s32 %s30, %s37
      %p39 = scmp.eq.s32.totalorder %s38, 0
      %s41 = sadd.s32 %s40, 1
      %s42 = scalar_select %p39, %s40, %s41
      %p45 = pneg %p39
      %p46 = scmp.eq.s32.totalorder %s30, 1
      %p47 = por %p45, %p46
      %p48 = scmp.ne.s32.totalorder %s40, %s43
      %p49 = scmp.eq.s32.totalorder %s30, 0
      %p50 = por %p48, %p49
      %p51 = scmp.ne.s32.totalorder %s40, %s43
      %p52 = scmp.eq.s32.totalorder %s35, 1
      %p53 = por %p51, %p52
      %p54 = scmp.ne.s32.totalorder %s43, %s44
      %p55 = scmp.eq.s32.totalorder %s35, 0
      %p56 = por %p54, %p55
      %p57 = scmp.ne.s32.totalorder %s43, %s44
      %p58 = scmp.eq.s32.totalorder %s36, 1
      %p59 = por %p57, %p58
      %p61 = scmp.ne.s32.totalorder %s44, %s60
      %p62 = scmp.eq.s32.totalorder %s36, 0
      %p63 = por %p61, %p62
      %s64 = ssub.s32 %s30, %s37
      %p65 = scmp.eq.s32.totalorder %s64, 0
      %s67 = sadd.s32 %s66, 1
      %s68 = scalar_select %p65, %s66, %s67
      %p71 = pneg %p65
      %p72 = scmp.eq.s32.totalorder %s30, 1
      %p73 = por %p71, %p72
      %p74 = scmp.ne.s32.totalorder %s66, %s69
      %p75 = scmp.eq.s32.totalorder %s30, 0
      %p76 = por %p74, %p75
      %p77 = scmp.ne.s32.totalorder %s66, %s69
      %p78 = scmp.eq.s32.totalorder %s35, 1
      %p79 = por %p77, %p78
      %p80 = scmp.ne.s32.totalorder %s69, %s70
      %p81 = scmp.eq.s32.totalorder %s35, 0
      %p82 = por %p80, %p81
      %p83 = scmp.ne.s32.totalorder %s69, %s70
      %p84 = scmp.eq.s32.totalorder %s36, 1
      %p85 = por %p83, %p84
      %p87 = scmp.ne.s32.totalorder %s70, %s86
      %p88 = scmp.eq.s32.totalorder %s36, 0
      %p89 = por %p87, %p88
      %s91 = sadd.s32 %s90, 1
      %p94 = scmp.eq.s32.totalorder %s30, 1
      %p95 = scmp.ne.s32.totalorder %s90, %s92
      %p96 = scmp.eq.s32.totalorder %s30, 0
      %p97 = por %p95, %p96
      %p98 = scmp.ne.s32.totalorder %s90, %s92
      %p99 = scmp.eq.s32.totalorder %s35, 1
      %p100 = por %p98, %p99
      %p101 = scmp.ne.s32.totalorder %s92, %s93
      %p102 = scmp.eq.s32.totalorder %s35, 0
      %p103 = por %p101, %p102
      %p104 = scmp.ne.s32.totalorder %s92, %s93
      %p105 = scmp.eq.s32.totalorder %s36, 1
      %p106 = por %p104, %p105
      %p108 = scmp.ne.s32.totalorder %s93, %s107
      %p109 = scmp.eq.s32.totalorder %s36, 0
      %p110 = por %p108, %p109
      %s112 = sadd.s32 %s111, 1
      %p115 = scmp.eq.s32.totalorder %s30, 1
      %p116 = scmp.ne.s32.totalorder %s111, %s113
      %p117 = scmp.eq.s32.totalorder %s30, 0
      %p118 = por %p116, %p117
      %p119 = scmp.ne.s32.totalorder %s111, %s113
      %p120 = scmp.eq.s32.totalorder %s35, 1
      %p121 = por %p119, %p120
      %p122 = scmp.ne.s32.totalorder %s113, %s114
      %p123 = scmp.eq.s32.totalorder %s35, 0
      %p124 = por %p122, %p123
      %p125 = scmp.ne.s32.totalorder %s113, %s114
      %p126 = scmp.eq.s32.totalorder %s36, 1
      %p127 = por %p125, %p126
      %p129 = scmp.ne.s32.totalorder %s114, %s128
      %p130 = scmp.eq.s32.totalorder %s36, 0
      %p131 = por %p129, %p130
      %s133 = sadd.s32 %s132, 1
      %p136 = scmp.eq.s32.totalorder %s30, 1
      %p137 = scmp.ne.s32.totalorder %s132, %s134
      %p138 = scmp.eq.s32.totalorder %s30, 0
      %p139 = por %p137, %p138
      %p140 = scmp.ne.s32.totalorder %s132, %s134
      %p141 = scmp.eq.s32.totalorder %s35, 1
      %p142 = por %p140, %p141
      %p143 = scmp.ne.s32.totalorder %s134, %s135
      %p144 = scmp.eq.s32.totalorder %s35, 0
      %p145 = por %p143, %p144
      %p146 = scmp.ne.s32.totalorder %s134, %s135
      %p147 = scmp.eq.s32.totalorder %s36, 1
      %p148 = por %p146, %p147
      %p150 = scmp.ne.s32.totalorder %s135, %s149
      %p151 = scmp.eq.s32.totalorder %s36, 0
      %p152 = por %p150, %p151
      %s154 = sadd.s32 %s153, 1
      %p157 = scmp.eq.s32.totalorder %s30, 1
      %p158 = scmp.ne.s32.totalorder %s153, %s155
      %p159 = scmp.eq.s32.totalorder %s30, 0
      %p160 = por %p158, %p159
      %p161 = scmp.ne.s32.totalorder %s153, %s155
      %p162 = scmp.eq.s32.totalorder %s35, 1
      %p163 = por %p161, %p162
      %p164 = scmp.ne.s32.totalorder %s155, %s156
      %p165 = scmp.eq.s32.totalorder %s35, 0
      %p166 = por %p164, %p165
      %p167 = scmp.ne.s32.totalorder %s155, %s156
      %p168 = scmp.eq.s32.totalorder %s36, 1
      %p169 = por %p167, %p168
      %p171 = scmp.ne.s32.totalorder %s156, %s170
      %p172 = scmp.eq.s32.totalorder %s36, 0
      %p173 = por %p171, %p172
      %s175 = sadd.s32 %s174, 1
      %p178 = scmp.eq.s32.totalorder %s30, 1
      %p179 = scmp.ne.s32.totalorder %s174, %s176
      %p180 = scmp.eq.s32.totalorder %s30, 0
      %p181 = por %p179, %p180
      %p182 = scmp.ne.s32.totalorder %s174, %s176
      %p183 = scmp.eq.s32.totalorder %s35, 1
      %p184 = por %p182, %p183
      %p185 = scmp.ne.s32.totalorder %s176, %s177
      %p186 = scmp.eq.s32.totalorder %s35, 0
      %p187 = por %p185, %p186
      %p188 = scmp.ne.s32.totalorder %s176, %s177
      %p189 = scmp.eq.s32.totalorder %s36, 1
      %p190 = por %p188, %p189
      %p192 = scmp.ne.s32.totalorder %s177, %s191
      %p193 = scmp.eq.s32.totalorder %s36, 0
      %p194 = por %p192, %p193
      %s196 = sadd.s32 %s195, 1
      %p199 = scmp.eq.s32.totalorder %s30, 1
      %p200 = scmp.ne.s32.totalorder %s195, %s197
      %p201 = scmp.eq.s32.totalorder %s30, 0
      %p202 = por %p200, %p201
      %p203 = scmp.ne.s32.totalorder %s195, %s197
      %p204 = scmp.eq.s32.totalorder %s35, 1
      %p205 = por %p203, %p204
      %p206 = scmp.ne.s32.totalorder %s197, %s198
      %p207 = scmp.eq.s32.totalorder %s35, 0
      %p208 = por %p206, %p207
      %p209 = scmp.ne.s32.totalorder %s197, %s198
      %p210 = scmp.eq.s32.totalorder %s36, 1
      %p211 = por %p209, %p210
      %p213 = scmp.ne.s32.totalorder %s198, %s212
      %p214 = scmp.eq.s32.totalorder %s36, 0
      %p215 = por %p213, %p214
      %s216 = ssub.s32 %s30, %s37
      %p217 = scmp.eq.s32.totalorder %s216, 0
      %s219 = sadd.s32 %s218, 1
      %s220 = scalar_select %p217, %s218, %s219
      %p223 = pneg %p217
      %p224 = scmp.eq.s32.totalorder %s30, 1
      %p225 = por %p223, %p224
      %p226 = scmp.ne.s32.totalorder %s218, %s221
      %p227 = scmp.eq.s32.totalorder %s30, 0
      %p228 = por %p226, %p227
      %p229 = scmp.ne.s32.totalorder %s218, %s221
      %p230 = scmp.eq.s32.totalorder %s35, 1
      %p231 = por %p229, %p230
      %p232 = scmp.ne.s32.totalorder %s221, %s222
      %p233 = scmp.eq.s32.totalorder %s35, 0
      %p234 = por %p232, %p233
      %p235 = scmp.ne.s32.totalorder %s221, %s222
      %p236 = scmp.eq.s32.totalorder %s36, 1
      %p237 = por %p235, %p236
      %p239 = scmp.ne.s32.totalorder %s222, %s238
      %p240 = scmp.eq.s32.totalorder %s36, 0
      %p241 = por %p239, %p240
      %s242 = ssub.s32 %s30, %s37
      %p243 = scmp.eq.s32.totalorder %s242, 0
      %s245 = sadd.s32 %s244, 1
      %s246 = scalar_select %p243, %s244, %s245
      %p249 = pneg %p243
      %p250 = scmp.eq.s32.totalorder %s30, 1
      %p251 = por %p249, %p250
      %p252 = scmp.ne.s32.totalorder %s244, %s247
      %p253 = scmp.eq.s32.totalorder %s30, 0
      %p254 = por %p252, %p253
      %p255 = scmp.ne.s32.totalorder %s244, %s247
      %p256 = scmp.eq.s32.totalorder %s35, 1
      %p257 = por %p255, %p256
      %p258 = scmp.ne.s32.totalorder %s247, %s248
      %p259 = scmp.eq.s32.totalorder %s35, 0
      %p260 = por %p258, %p259
      %p261 = scmp.ne.s32.totalorder %s247, %s248
      %p262 = scmp.eq.s32.totalorder %s36, 1
      %p263 = por %p261, %p262
      %p265 = scmp.ne.s32.totalorder %s248, %s264
      %p266 = scmp.eq.s32.totalorder %s36, 0
      %p267 = por %p265, %p266
      %s268 = ssub.s32 %s30, %s37
      %p269 = scmp.eq.s32.totalorder %s268, 0
      %s271 = sadd.s32 %s270, 1
      %s272 = scalar_select %p269, %s270, %s271
      %p275 = pneg %p269
      %p276 = scmp.eq.s32.totalorder %s30, 1
      %p277 = por %p275, %p276
      %p278 = scmp.ne.s32.totalorder %s270, %s273
      %p279 = scmp.eq.s32.totalorder %s30, 0
      %p280 = por %p278, %p279
      %p281 = scmp.ne.s32.totalorder %s270, %s273
      %p282 = scmp.eq.s32.totalorder %s35, 1
      %p283 = por %p281, %p282
      %p284 = scmp.ne.s32.totalorder %s273, %s274
      %p285 = scmp.eq.s32.totalorder %s35, 0
      %p286 = por %p284, %p285
      %p287 = scmp.ne.s32.totalorder %s273, %s274
      %p288 = scmp.eq.s32.totalorder %s36, 1
      %p289 = por %p287, %p288
      %p291 = scmp.ne.s32.totalorder %s274, %s290
      %p292 = scmp.eq.s32.totalorder %s36, 0
      %p293 = por %p291, %p292
      %p294 = scmp.le.s32.totalorder 1, %s30
      %p295 = scmp.lt.s32.totalorder %s30, 3
      %p296 = pnand %p294, %p295
      %p297 = pneg %p296
      // Predicated region
      $region9: #{tpu_custom_call.1} parent=5 // pred_check
        _
      $region10: #{tpu_custom_call.1} parent=5 // pred_check_branch
        %299 = sbr.rel (%p296) target = $region12
      $region11: #{tpu_custom_call.1} parent=5 // pred_region
        %s300 = ssub.s32 %s30, 1
        // Predicated region
        $region13: #{tpu_custom_call.1} parent=11 // pred_check
          %p301 = pneg %p103
        $region14: #{tpu_custom_call.1} parent=11 // pred_check_branch
          %303 = sbr.rel (%p301) target = $region16
        $region15: #{tpu_custom_call.1} parent=11 // pred_region
          %s305 = ssub.s32 2048, 2048
          %306 = vsyncadd [#allocation6], %s305
          %s307 = sshll.u32 [#allocation7], 4
          %s308 = int_to_ptr.vmem [resolvable:$true] %s307
          %313 = dma.hbm_to_vmem [thread:$0]  %s2, 2048, %s308, [#allocation6], 128, 128, 8
        $region16: #{tpu_custom_call.1} parent=11 // pred_fallthru
          _
        // Predicated region
        $region17: #{tpu_custom_call.1} parent=11 // pred_check
          %p314 = pneg %p124
        $region18: #{tpu_custom_call.1} parent=11 // pred_check_branch
          %316 = sbr.rel (%p314) target = $region20
        $region19: #{tpu_custom_call.1} parent=11 // pred_region
          _
        $region20: #{tpu_custom_call.1} parent=11 // pred_fallthru
          _
        // Predicated region
        $region21: #{tpu_custom_call.1} parent=11 // pred_check
          %p317 = pneg %p145
        $region22: #{tpu_custom_call.1} parent=11 // pred_check_branch
          %319 = sbr.rel (%p317) target = $region24
        $region23: #{tpu_custom_call.1} parent=11 // pred_region
          %s321 = ssub.s32 2048, 2048
          %322 = vsyncadd [#allocation9], %s321
          %s323 = sshll.u32 [#allocation8], 4
          %s324 = int_to_ptr.vmem [resolvable:$true] %s323
          %329 = dma.hbm_to_vmem [thread:$0]  %s4, 2048, %s324, [#allocation9], 128, 128, 8
        $region24: #{tpu_custom_call.1} parent=11 // pred_fallthru
          _
        // Predicated region
        $region25: #{tpu_custom_call.1} parent=11 // pred_check
          %p330 = pneg %p166
        $region26: #{tpu_custom_call.1} parent=11 // pred_check_branch
          %332 = sbr.rel (%p330) target = $region28
        $region27: #{tpu_custom_call.1} parent=11 // pred_region
          _
        $region28: #{tpu_custom_call.1} parent=11 // pred_fallthru
          _
        // Predicated region
        $region29: #{tpu_custom_call.1} parent=11 // pred_check
          %p333 = pneg %p187
        $region30: #{tpu_custom_call.1} parent=11 // pred_check_branch
          %335 = sbr.rel (%p333) target = $region32
        $region31: #{tpu_custom_call.1} parent=11 // pred_region
          %s337 = ssub.s32 4096, 4096
          %338 = vsyncadd [#allocation9], %s337
          %s339 = sshll.u32 [#allocation10], 4
          %s340 = int_to_ptr.vmem [resolvable:$true] %s339
          %345 = dma.hbm_to_vmem [thread:$0]  %s6, 4096, %s340, [#allocation9], 256, 256, 16
        $region32: #{tpu_custom_call.1} parent=11 // pred_fallthru
          _
        // Predicated region
        $region33: #{tpu_custom_call.1} parent=11 // pred_check
          %p346 = pneg %p208
        $region34: #{tpu_custom_call.1} parent=11 // pred_check_branch
          %348 = sbr.rel (%p346) target = $region36
        $region35: #{tpu_custom_call.1} parent=11 // pred_region
          _
        $region36: #{tpu_custom_call.1} parent=11 // pred_fallthru
          _
      $region12: #{tpu_custom_call.1} parent=5 // pred_fallthru
        _
      %p349 = scmp.lt.s32.totalorder %s30, 2
      // Predicated region
      $region37: #{tpu_custom_call.1} parent=5 // pred_check
        %p350 = pneg %p349
      $region38: #{tpu_custom_call.1} parent=5 // pred_check_branch
        %352 = sbr.rel (%p350) target = $region40
      $region39: #{tpu_custom_call.1} parent=5 // pred_region
        // Predicated region
        $region41: #{tpu_custom_call.1} parent=39 // pred_check
          %p353 = pneg %p50
        $region42: #{tpu_custom_call.1} parent=39 // pred_check_branch
          %355 = sbr.rel (%p353) target = $region44
        $region43: #{tpu_custom_call.1} parent=39 // pred_region
          %s356 = sand.u32 %s40, 1
          %s357 = scalar_lea.sflag [#allocation3], %s356
          %s358 = sand.u32 %s40, 1
          %s359 = smul.addr %s358, 16
          %s360 = scalar_lea.vmem [#allocation2], %s359
          %s361 = smul.u32 2, %s30
          %s363 = ssub.s32 256, 256
          %364 = vsyncadd %s357, %s363
          %s365 = smul.addr %s361, 128
          %s366 = scalar_lea.hbm %s0, %s365
          %s367 = sshll.u32 %s360, 4
          %s368 = int_to_ptr.vmem [resolvable:$true] %s367
          %373 = dma.hbm_to_vmem [thread:$0]  %s366, 256, %s368, %s357, 128, 128, 8
        $region44: #{tpu_custom_call.1} parent=39 // pred_fallthru
          _
        // Predicated region
        $region45: #{tpu_custom_call.1} parent=39 // pred_check
          %p374 = pneg %p76
        $region46: #{tpu_custom_call.1} parent=39 // pred_check_branch
          %376 = sbr.rel (%p374) target = $region48
        $region47: #{tpu_custom_call.1} parent=39 // pred_region
          %s377 = sand.u32 %s30, 1
          %s378 = scalar_lea.sflag [#allocation6], %s377
          %s379 = sand.u32 %s66, 1
          %s380 = smul.addr %s379, 16
          %s381 = scalar_lea.vmem [#allocation5], %s380
          %s382 = smul.u32 2, %s30
          %s384 = ssub.s32 256, 256
          %385 = vsyncadd %s378, %s384
          %s386 = smul.addr %s382, 128
          %s387 = scalar_lea.hbm %s1, %s386
          %s388 = sshll.u32 %s381, 4
          %s389 = int_to_ptr.vmem [resolvable:$true] %s388
          %394 = dma.hbm_to_vmem [thread:$0]  %s387, 256, %s389, %s378, 128, 128, 8
        $region48: #{tpu_custom_call.1} parent=39 // pred_fallthru
          _
      $region40: #{tpu_custom_call.1} parent=5 // pred_fallthru
        _
      %p395 = scmp.le.s32.totalorder 1, %s30
      %p396 = scmp.lt.s32.totalorder %s30, 3
      %p397 = pnand %p395, %p396
      %p398 = pneg %p397
      // Predicated region
      $region49: #{tpu_custom_call.1} parent=5 // pred_check
        _
      $region50: #{tpu_custom_call.1} parent=5 // pred_check_branch
        %400 = sbr.rel (%p397) target = $region52
      $region51: #{tpu_custom_call.1} parent=5 // pred_region
        %s401 = ssub.s32 %s30, 1
        %s402 = sand.u32 %s43, 1
        %s403 = scalar_lea.sflag [#allocation3], %s402
        %s404 = sand.u32 %s43, 1
        %s405 = smul.addr %s404, 16
        %s406 = scalar_lea.vmem [#allocation2], %s405
        // Predicated region
        $region53: #{tpu_custom_call.1} parent=51 // pred_check
          %p407 = pneg %p56
        $region54: #{tpu_custom_call.1} parent=51 // pred_check_branch
          %409 = sbr.rel (%p407) target = $region56
        $region55: #{tpu_custom_call.1} parent=51 // pred_region
          %410 = dma.done %s403, 256
        $region56: #{tpu_custom_call.1} parent=51 // pred_fallthru
          _
        %s411 = sand.u32 %s35, 1
        %s412 = scalar_lea.sflag [#allocation6], %s411
        %s413 = sand.u32 %s69, 1
        %s414 = smul.addr %s413, 16
        %s415 = scalar_lea.vmem [#allocation5], %s414
        // Predicated region
        $region57: #{tpu_custom_call.1} parent=51 // pred_check
          %p416 = pneg %p82
        $region58: #{tpu_custom_call.1} parent=51 // pred_check_branch
          %418 = sbr.rel (%p416) target = $region60
        $region59: #{tpu_custom_call.1} parent=51 // pred_region
          %419 = dma.done %s412, 256
        $region60: #{tpu_custom_call.1} parent=51 // pred_fallthru
          _
        // Predicated region
        $region61: #{tpu_custom_call.1} parent=51 // pred_check
          %p420 = pneg %p103
        $region62: #{tpu_custom_call.1} parent=51 // pred_check_branch
          %422 = sbr.rel (%p420) target = $region64
        $region63: #{tpu_custom_call.1} parent=51 // pred_region
          %423 = dma.done [#allocation6], 2048
        $region64: #{tpu_custom_call.1} parent=51 // pred_fallthru
          _
        // Predicated region
        $region65: #{tpu_custom_call.1} parent=51 // pred_check
          %p424 = pneg %p145
        $region66: #{tpu_custom_call.1} parent=51 // pred_check_branch
          %426 = sbr.rel (%p424) target = $region68
        $region67: #{tpu_custom_call.1} parent=51 // pred_region
          %427 = dma.done [#allocation9], 2048
        $region68: #{tpu_custom_call.1} parent=51 // pred_fallthru
          _
        // Predicated region
        $region69: #{tpu_custom_call.1} parent=51 // pred_check
          %p428 = pneg %p187
        $region70: #{tpu_custom_call.1} parent=51 // pred_check_branch
          %430 = sbr.rel (%p428) target = $region72
        $region71: #{tpu_custom_call.1} parent=51 // pred_region
          %431 = dma.done [#allocation9], 4096
        $region72: #{tpu_custom_call.1} parent=51 // pred_fallthru
          _
        %s432 = sand.u32 %s43, 1
        %s433 = scalar_lea.sflag [#allocation3], %s432
        %s434 = sand.u32 %s43, 1
        %s435 = smul.addr %s434, 16
        %s436 = scalar_lea.vmem [#allocation2], %s435
        %p437 = pneg %p56
        %p438 = pneg %p53
        %s439 = sand.u32 %s35, 1
        %s440 = scalar_lea.sflag [#allocation6], %s439
        %s441 = sand.u32 %s69, 1
        %s442 = smul.addr %s441, 16
        %s443 = scalar_lea.vmem [#allocation5], %s442
        %p444 = pneg %p82
        %p445 = pneg %p79
        %p446 = pneg %p103
        %p447 = pneg %p100
        %p448 = pneg %p124
        %p449 = pneg %p121
        %p450 = pneg %p145
        %p451 = pneg %p142
        %p452 = pneg %p166
        %p453 = pneg %p163
        %p454 = pneg %p187
        %p455 = pneg %p184
        %p456 = pneg %p208
        %p457 = pneg %p205
        %p458 = pneg %p234
        %p459 = pneg %p231
        %s460 = sand.u32 %s221, 1
        %s461 = scalar_lea.sflag [#allocation4], %s460
        %s462 = sand.u32 %s221, 1
        %s463 = smul.addr %s462, 16
        %s464 = scalar_lea.vmem [#allocation11], %s463
        %p465 = pneg %p260
        %p466 = pneg %p257
        %s467 = sand.u32 %s35, 1
        %s468 = scalar_lea.sflag [#allocation13], %s467
        %s469 = sand.u32 %s247, 1
        %s470 = smul.addr %s469, 16
        %s471 = scalar_lea.vmem [#allocation12], %s470
        %p472 = pneg %p286
        %p473 = pneg %p283
        %s474 = sand.u32 %s35, 1
        %s475 = scalar_lea.sflag [#allocation13], %s474
        %s476 = sand.u32 %s273, 1
        %s477 = smul.addr %s476, 16
        %s478 = scalar_lea.vmem [#allocation14], %s477
        %s479 = smul.u32 2, %s35
        %s480 = smul.u32 2, %s35
        %s481 = smul.u32 2, %s35
        %s482 = smul.u32 2, %s35
        %s483 = smul.u32 2, %s35
        %v484 = vld [vmem:[%s406] sm:$0xff]
        %v485 = vld [vmem:[%s406 + $0x8] sm:$0xff]
        %v486 = vld [vmem:[%s415] sm:$0xff]
        %v487 = vld [vmem:[%s415 + $0x8] sm:$0xff]
        %v488 = vld [vmem:[#allocation7] sm:$0xff]
        %v489 = vld [vmem:[#allocation7 + $0x8] sm:$0xff]
        %v490 = vld [vmem:[#allocation7 + $0x10] sm:$0xff]
        %v491 = vld [vmem:[#allocation7 + $0x18] sm:$0xff]
        %v492 = vld [vmem:[#allocation7 + $0x20] sm:$0xff]
        %v493 = vld [vmem:[#allocation7 + $0x28] sm:$0xff]
        %v494 = vld [vmem:[#allocation7 + $0x30] sm:$0xff]
        %v495 = vld [vmem:[#allocation7 + $0x38] sm:$0xff]
        %v496 = vld [vmem:[#allocation7 + $0x40] sm:$0xff]
        %v497 = vld [vmem:[#allocation7 + $0x48] sm:$0xff]
        %v498 = vld [vmem:[#allocation7 + $0x50] sm:$0xff]
        %v499 = vld [vmem:[#allocation7 + $0x58] sm:$0xff]
        %v500 = vld [vmem:[#allocation7 + $0x60] sm:$0xff]
        %v501 = vld [vmem:[#allocation7 + $0x68] sm:$0xff]
        %v502 = vld [vmem:[#allocation7 + $0x70] sm:$0xff]
        %v503 = vld [vmem:[#allocation7 + $0x78] sm:$0xff]
        %v504 = vld [vmem:[%s3] sm:$0x1]
        %v506 = vlaneseq
        %v507 = vshrl.u32 %v506, 7
        %v508 = vsub.s32 0, %v507
        %v509 = vrot.slane %v504, %v508
        %511 = vmatprep.subr.mxu0 0.0
        %512 = vmatpush1.msra.mxu0 %v488
        %513 = vmatprep.subr.mxu0 0.0
        %514 = vmatpush1.msra.mxu0 %v489
        %515 = vmatprep.subr.mxu0 0.0
        %516 = vmatpush1.msra.mxu0 %v490
        %517 = vmatprep.subr.mxu0 0.0
        %518 = vmatpush1.msra.mxu0 %v491
        %519 = vmatprep.subr.mxu0 0.0
        %520 = vmatpush1.msra.mxu0 %v492
        %521 = vmatprep.subr.mxu0 0.0
        %522 = vmatpush1.msra.mxu0 %v493
        %523 = vmatprep.subr.mxu0 0.0
        %524 = vmatpush1.msra.mxu0 %v494
        %525 = vmatprep.subr.mxu0 0.0
        %526 = vmatpush1.msra.mxu0 %v495
        %527 = vmatprep.subr.mxu0 0.0
        %528 = vmatpush1.msra.mxu0 %v496
        %529 = vmatprep.subr.mxu0 0.0
        %530 = vmatpush1.msra.mxu0 %v497
        %531 = vmatprep.subr.mxu0 0.0
        %532 = vmatpush1.msra.mxu0 %v498
        %533 = vmatprep.subr.mxu0 0.0
        %534 = vmatpush1.msra.mxu0 %v499
        %535 = vmatprep.subr.mxu0 0.0
        %536 = vmatpush1.msra.mxu0 %v500
        %537 = vmatprep.subr.mxu0 0.0
        %538 = vmatpush1.msra.mxu0 %v501
        %539 = vmatprep.subr.mxu0 0.0
        %540 = vmatpush1.msra.mxu0 %v502
        %541 = vmatprep.subr.mxu0 0.0
        %542 = vmatpush1.msra.mxu0 %v503
        %543 = vmatprep.subr.mxu0 0.0
        %544 = vmatpush1.msra.mxu0 0.0
        %545 = vmatprep.subr.mxu0 0.0
        %546 = vmatpush1.msra.mxu0 0.0
        %547 = vmatprep.subr.mxu0 0.0
        %548 = vmatpush1.msra.mxu0 0.0
        %549 = vmatprep.subr.mxu0 0.0
        %550 = vmatpush1.msra.mxu0 0.0
        %551 = vmatprep.subr.mxu0 0.0
        %552 = vmatpush1.msra.mxu0 0.0
        %553 = vmatprep.subr.mxu0 0.0
        %554 = vmatpush1.msra.mxu0 0.0
        %555 = vmatprep.subr.mxu0 0.0
        %556 = vmatpush1.msra.mxu0 0.0
        %557 = vmatprep.subr.mxu0 0.0
        %558 = vmatpush1.msra.mxu0 0.0
        %559 = vmatprep.subr.mxu0 0.0
        %560 = vmatpush1.msra.mxu0 0.0
        %561 = vmatprep.subr.mxu0 0.0
        %562 = vmatpush1.msra.mxu0 0.0
        %563 = vmatprep.subr.mxu0 0.0
        %564 = vmatpush1.msra.mxu0 0.0
        %565 = vmatprep.subr.mxu0 0.0
        %566 = vmatpush1.msra.mxu0 0.0
        %567 = vmatprep.subr.mxu0 0.0
        %568 = vmatpush1.msra.mxu0 0.0
        %569 = vmatprep.subr.mxu0 0.0
        %570 = vmatpush1.msra.mxu0 0.0
        %571 = vmatprep.subr.mxu0 0.0
        %572 = vmatpush1.msra.mxu0 0.0
        %573 = vmatprep.subr.mxu0 0.0
        %574 = vmatpush1.msra.mxu0 0.0
        %575 = vmatprep.mubr.f32.mxu0 0.0
        %576 = vmatmul.mubr.f32.gmra.mrb[0].mxu0 %v484
        %v577 = vpop.f32.mrb[0].mxu0
        %v578 = vadd.f32 %v509, %v577
        %v579 = vpop.f32.mrb[0].mxu0
        %580 = vmatprep.mubr.f32.mxu0 0.0
        %581 = vmatmul.mubr.f32.gmra.mrb[0].mxu0 %v485
        %v582 = vpop.f32.mrb[0].mxu0
        %v583 = vadd.f32 %v509, %v582
        %v584 = vpop.f32.mrb[0].mxu0
        %585 = vdwg.mxu0
        %vm586 = vcmp.ge.f32.partialorder %v578, 0.0
        %vm587 = vcmp.ge.f32.partialorder %v583, 0.0
        %v588 = vmul.f32 %v578, 0.01
        %v589 = vmul.f32 %v583, 0.01
        %v590 = vsel %vm586, %v578, %v588
        %v591 = vsel %vm587, %v583, %v589
        %v592 = vld [vmem:[#allocation8] sm:$0xff]
        %v593 = vld [vmem:[#allocation8 + $0x8] sm:$0xff]
        %v594 = vld [vmem:[#allocation8 + $0x10] sm:$0xff]
        %v595 = vld [vmem:[#allocation8 + $0x18] sm:$0xff]
        %v596 = vld [vmem:[#allocation8 + $0x20] sm:$0xff]
        %v597 = vld [vmem:[#allocation8 + $0x28] sm:$0xff]
        %v598 = vld [vmem:[#allocation8 + $0x30] sm:$0xff]
        %v599 = vld [vmem:[#allocation8 + $0x38] sm:$0xff]
        %v600 = vld [vmem:[#allocation8 + $0x40] sm:$0xff]
        %v601 = vld [vmem:[#allocation8 + $0x48] sm:$0xff]
        %v602 = vld [vmem:[#allocation8 + $0x50] sm:$0xff]
        %v603 = vld [vmem:[#allocation8 + $0x58] sm:$0xff]
        %v604 = vld [vmem:[#allocation8 + $0x60] sm:$0xff]
        %v605 = vld [vmem:[#allocation8 + $0x68] sm:$0xff]
        %v606 = vld [vmem:[#allocation8 + $0x70] sm:$0xff]
        %v607 = vld [vmem:[#allocation8 + $0x78] sm:$0xff]
        %v608 = vld [vmem:[%s5] sm:$0x1]
        %v610 = vlaneseq
        %v611 = vshrl.u32 %v610, 7
        %v612 = vsub.s32 0, %v611
        %v613 = vrot.slane %v608, %v612
        %615 = vmatprep.subr.mxu0 0.0
        %616 = vmatpush1.msra.mxu0 %v592
        %617 = vmatprep.subr.mxu0 0.0
        %618 = vmatpush1.msra.mxu0 %v593
        %619 = vmatprep.subr.mxu0 0.0
        %620 = vmatpush1.msra.mxu0 %v594
        %621 = vmatprep.subr.mxu0 0.0
        %622 = vmatpush1.msra.mxu0 %v595
        %623 = vmatprep.subr.mxu0 0.0
        %624 = vmatpush1.msra.mxu0 %v596
        %625 = vmatprep.subr.mxu0 0.0
        %626 = vmatpush1.msra.mxu0 %v597
        %627 = vmatprep.subr.mxu0 0.0
        %628 = vmatpush1.msra.mxu0 %v598
        %629 = vmatprep.subr.mxu0 0.0
        %630 = vmatpush1.msra.mxu0 %v599
        %631 = vmatprep.subr.mxu0 0.0
        %632 = vmatpush1.msra.mxu0 %v600
        %633 = vmatprep.subr.mxu0 0.0
        %634 = vmatpush1.msra.mxu0 %v601
        %635 = vmatprep.subr.mxu0 0.0
        %636 = vmatpush1.msra.mxu0 %v602
        %637 = vmatprep.subr.mxu0 0.0
        %638 = vmatpush1.msra.mxu0 %v603
        %639 = vmatprep.subr.mxu0 0.0
        %640 = vmatpush1.msra.mxu0 %v604
        %641 = vmatprep.subr.mxu0 0.0
        %642 = vmatpush1.msra.mxu0 %v605
        %643 = vmatprep.subr.mxu0 0.0
        %644 = vmatpush1.msra.mxu0 %v606
        %645 = vmatprep.subr.mxu0 0.0
        %646 = vmatpush1.msra.mxu0 %v607
        %647 = vmatprep.subr.mxu0 0.0
        %648 = vmatpush1.msra.mxu0 0.0
        %649 = vmatprep.subr.mxu0 0.0
        %650 = vmatpush1.msra.mxu0 0.0
        %651 = vmatprep.subr.mxu0 0.0
        %652 = vmatpush1.msra.mxu0 0.0
        %653 = vmatprep.subr.mxu0 0.0
        %654 = vmatpush1.msra.mxu0 0.0
        %655 = vmatprep.subr.mxu0 0.0
        %656 = vmatpush1.msra.mxu0 0.0
        %657 = vmatprep.subr.mxu0 0.0
        %658 = vmatpush1.msra.mxu0 0.0
        %659 = vmatprep.subr.mxu0 0.0
        %660 = vmatpush1.msra.mxu0 0.0
        %661 = vmatprep.subr.mxu0 0.0
        %662 = vmatpush1.msra.mxu0 0.0
        %663 = vmatprep.subr.mxu0 0.0
        %664 = vmatpush1.msra.mxu0 0.0
        %665 = vmatprep.subr.mxu0 0.0
        %666 = vmatpush1.msra.mxu0 0.0
        %667 = vmatprep.subr.mxu0 0.0
        %668 = vmatpush1.msra.mxu0 0.0
        %669 = vmatprep.subr.mxu0 0.0
        %670 = vmatpush1.msra.mxu0 0.0
        %671 = vmatprep.subr.mxu0 0.0
        %672 = vmatpush1.msra.mxu0 0.0
        %673 = vmatprep.subr.mxu0 0.0
        %674 = vmatpush1.msra.mxu0 0.0
        %675 = vmatprep.subr.mxu0 0.0
        %676 = vmatpush1.msra.mxu0 0.0
        %677 = vmatprep.subr.mxu0 0.0
        %678 = vmatpush1.msra.mxu0 0.0
        %679 = vmatprep.mubr.f32.mxu0 0.0
        %680 = vmatmul.mubr.f32.gmra.mrb[0].mxu0 %v486
        %v681 = vpop.f32.mrb[0].mxu0
        %v682 = vadd.f32 %v613, %v681
        %v683 = vpop.f32.mrb[0].mxu0
        %684 = vmatprep.mubr.f32.mxu0 0.0
        %685 = vmatmul.mubr.f32.gmra.mrb[0].mxu0 %v487
        %v686 = vpop.f32.mrb[0].mxu0
        %v687 = vadd.f32 %v613, %v686
        %v688 = vpop.f32.mrb[0].mxu0
        %689 = vdwg.mxu0
        %vm690 = vcmp.ge.f32.partialorder %v682, 0.0
        %vm691 = vcmp.ge.f32.partialorder %v687, 0.0
        %v692 = vmul.f32 %v682, 0.01
        %v693 = vmul.f32 %v687, 0.01
        %v694 = vsel %vm690, %v682, %v692
        %v695 = vsel %vm691, %v687, %v693
        %v696 = vadd.f32 %v590, %v694
        %v697 = vadd.f32 %v591, %v695
        %v698 = vmul.f32 %v696, %v696
        %v699 = vmul.f32 %v697, %v697
        %700 = vadd.xlane.f32.xlu0 %v698
        %v701 = vpop.xlane.xlu0 %700
        %702 = vadd.xlane.f32.xlu0 %v699
        %v703 = vpop.xlane.xlu0 %702
        %v704 = vmax.f32 %v701, 1e-24
        %v705 = vmax.f32 %v703, 1e-24
        %v706 = vrsqrt.pop %v704
        %v707 = vrsqrt.pop %v705
        %v708 = vmul.f32 %v696, %v706
        %v709 = vmul.f32 %v697, %v707
        %710 = vst [vmem:[%s478] sm:$0xff] %v708
        %711 = vst [vmem:[%s478 + $0x8] sm:$0xff] %v709
        %v712 = vld [vmem:[#allocation10] sm:$0xff]
        %v713 = vld [vmem:[#allocation10 + $0x8] sm:$0xff]
        %v714 = vld [vmem:[#allocation10 + $0x10] sm:$0xff]
        %v715 = vld [vmem:[#allocation10 + $0x18] sm:$0xff]
        %v716 = vld [vmem:[#allocation10 + $0x20] sm:$0xff]
        %v717 = vld [vmem:[#allocation10 + $0x28] sm:$0xff]
        %v718 = vld [vmem:[#allocation10 + $0x30] sm:$0xff]
        %v719 = vld [vmem:[#allocation10 + $0x38] sm:$0xff]
        %v720 = vld [vmem:[#allocation10 + $0x40] sm:$0xff]
        %v721 = vld [vmem:[#allocation10 + $0x48] sm:$0xff]
        %v722 = vld [vmem:[#allocation10 + $0x50] sm:$0xff]
        %v723 = vld [vmem:[#allocation10 + $0x58] sm:$0xff]
        %v724 = vld [vmem:[#allocation10 + $0x60] sm:$0xff]
        %v725 = vld [vmem:[#allocation10 + $0x68] sm:$0xff]
        %v726 = vld [vmem:[#allocation10 + $0x70] sm:$0xff]
        %v727 = vld [vmem:[#allocation10 + $0x78] sm:$0xff]
        %v728 = vld [vmem:[#allocation10 + $0x80] sm:$0xff]
        %v729 = vld [vmem:[#allocation10 + $0x88] sm:$0xff]
        %v730 = vld [vmem:[#allocation10 + $0x90] sm:$0xff]
        %v731 = vld [vmem:[#allocation10 + $0x98] sm:$0xff]
        %v732 = vld [vmem:[#allocation10 + $0xa0] sm:$0xff]
        %v733 = vld [vmem:[#allocation10 + $0xa8] sm:$0xff]
        %v734 = vld [vmem:[#allocation10 + $0xb0] sm:$0xff]
        %v735 = vld [vmem:[#allocation10 + $0xb8] sm:$0xff]
        %v736 = vld [vmem:[#allocation10 + $0xc0] sm:$0xff]
        %v737 = vld [vmem:[#allocation10 + $0xc8] sm:$0xff]
        %v738 = vld [vmem:[#allocation10 + $0xd0] sm:$0xff]
        %v739 = vld [vmem:[#allocation10 + $0xd8] sm:$0xff]
        %v740 = vld [vmem:[#allocation10 + $0xe0] sm:$0xff]
        %v741 = vld [vmem:[#allocation10 + $0xe8] sm:$0xff]
        %v742 = vld [vmem:[#allocation10 + $0xf0] sm:$0xff]
        %v743 = vld [vmem:[#allocation10 + $0xf8] sm:$0xff]
        %v744 = vld [vmem:[%s7] sm:$0x3]
        %v746 = vlaneseq
        %v747 = vshrl.u32 %v746, 7
        %v748 = vsub.s32 0, %v747
        %v749 = vrot.slane %v744, %v748
        %v750 = vlaneseq
        %v751 = vshrl.u32 %v750, 7
        %v752 = vsub.s32 1, %v751
        %v753 = vrot.slane %v744, %v752
        %756 = vmatprep.subr.mxu0 %v713
        %757 = vmatpush1.msra.mxu0 %v712
        %758 = vmatprep.subr.mxu0 %v715
        %759 = vmatpush1.msra.mxu0 %v714
        %760 = vmatprep.subr.mxu0 %v717
        %761 = vmatpush1.msra.mxu0 %v716
        %762 = vmatprep.subr.mxu0 %v719
        %763 = vmatpush1.msra.mxu0 %v718
        %764 = vmatprep.subr.mxu0 %v721
        %765 = vmatpush1.msra.mxu0 %v720
        %766 = vmatprep.subr.mxu0 %v723
        %767 = vmatpush1.msra.mxu0 %v722
        %768 = vmatprep.subr.mxu0 %v725
        %769 = vmatpush1.msra.mxu0 %v724
        %770 = vmatprep.subr.mxu0 %v727
        %771 = vmatpush1.msra.mxu0 %v726
        %772 = vmatprep.subr.mxu0 %v729
        %773 = vmatpush1.msra.mxu0 %v728
        %774 = vmatprep.subr.mxu0 %v731
        %775 = vmatpush1.msra.mxu0 %v730
        %776 = vmatprep.subr.mxu0 %v733
        %777 = vmatpush1.msra.mxu0 %v732
        %778 = vmatprep.subr.mxu0 %v735
        %779 = vmatpush1.msra.mxu0 %v734
        %780 = vmatprep.subr.mxu0 %v737
        %781 = vmatpush1.msra.mxu0 %v736
        %782 = vmatprep.subr.mxu0 %v739
        %783 = vmatpush1.msra.mxu0 %v738
        %784 = vmatprep.subr.mxu0 %v741
        %785 = vmatpush1.msra.mxu0 %v740
        %786 = vmatprep.subr.mxu0 %v743
        %787 = vmatpush1.msra.mxu0 %v742
        %788 = vmatprep.subr.mxu0 0.0
        %789 = vmatpush1.msra.mxu0 0.0
        %790 = vmatprep.subr.mxu0 0.0
        %791 = vmatpush1.msra.mxu0 0.0
        %792 = vmatprep.subr.mxu0 0.0
        %793 = vmatpush1.msra.mxu0 0.0
        %794 = vmatprep.subr.mxu0 0.0
        %795 = vmatpush1.msra.mxu0 0.0
        %796 = vmatprep.subr.mxu0 0.0
        %797 = vmatpush1.msra.mxu0 0.0
        %798 = vmatprep.subr.mxu0 0.0
        %799 = vmatpush1.msra.mxu0 0.0
        %800 = vmatprep.subr.mxu0 0.0
        %801 = vmatpush1.msra.mxu0 0.0
        %802 = vmatprep.subr.mxu0 0.0
        %803 = vmatpush1.msra.mxu0 0.0
        %804 = vmatprep.subr.mxu0 0.0
        %805 = vmatpush1.msra.mxu0 0.0
        %806 = vmatprep.subr.mxu0 0.0
        %807 = vmatpush1.msra.mxu0 0.0
        %808 = vmatprep.subr.mxu0 0.0
        %809 = vmatpush1.msra.mxu0 0.0
        %810 = vmatprep.subr.mxu0 0.0
        %811 = vmatpush1.msra.mxu0 0.0
        %812 = vmatprep.subr.mxu0 0.0
        %813 = vmatpush1.msra.mxu0 0.0
        %814 = vmatprep.subr.mxu0 0.0
        %815 = vmatpush1.msra.mxu0 0.0
        %816 = vmatprep.subr.mxu0 0.0
        %817 = vmatpush1.msra.mxu0 0.0
        %818 = vmatprep.subr.mxu0 0.0
        %819 = vmatpush1.msra.mxu0 0.0
        %820 = vmatprep.mubr.f32.mxu0 0.0
        %821 = vmatmul.mubr.f32.gmra.mrb[0].mxu0 %v708
        %v822 = vpop.f32.mrb[0].mxu0
        %v823 = vadd.f32 %v749, %v822
        %v824 = vpop.f32.mrb[0].mxu0
        %v825 = vadd.f32 %v753, %v824
        %826 = vmatprep.mubr.f32.mxu0 0.0
        %827 = vmatmul.mubr.f32.gmra.mrb[0].mxu0 %v709
        %v828 = vpop.f32.mrb[0].mxu0
        %v829 = vadd.f32 %v749, %v828
        %v830 = vpop.f32.mrb[0].mxu0
        %v831 = vadd.f32 %v753, %v830
        %832 = vdwg.mxu0
        %vm833 = vcmp.ge.f32.partialorder %v823, 0.0
        %vm834 = vcmp.ge.f32.partialorder %v825, 0.0
        %vm835 = vcmp.ge.f32.partialorder %v829, 0.0
        %vm836 = vcmp.ge.f32.partialorder %v831, 0.0
        %v837 = vmul.f32 %v823, 0.01
        %v838 = vmul.f32 %v825, 0.01
        %v839 = vmul.f32 %v829, 0.01
        %v840 = vmul.f32 %v831, 0.01
        %v841 = vsel %vm833, %v823, %v837
        %v842 = vsel %vm834, %v825, %v838
        %v843 = vsel %vm835, %v829, %v839
        %v844 = vsel %vm836, %v831, %v840
        %845 = vst [vmem:[%s464] sm:$0xff] %v841
        %846 = vst [vmem:[%s464 + $0x8] sm:$0xff] %v843
        %847 = vst [vmem:[%s471] sm:$0xff] %v842
        %848 = vst [vmem:[%s471 + $0x8] sm:$0xff] %v844
        %s849 = sand.u32 %s221, 1
        %s850 = scalar_lea.sflag [#allocation4], %s849
        %s851 = sand.u32 %s221, 1
        %s852 = smul.addr %s851, 16
        %s853 = scalar_lea.vmem [#allocation11], %s852
        %s854 = sand.u32 %s35, 1
        %s855 = scalar_lea.sflag [#allocation13], %s854
        %s856 = sand.u32 %s247, 1
        %s857 = smul.addr %s856, 16
        %s858 = scalar_lea.vmem [#allocation12], %s857
        %s859 = sand.u32 %s35, 1
        %s860 = scalar_lea.sflag [#allocation13], %s859
        %s861 = sand.u32 %s273, 1
        %s862 = smul.addr %s861, 16
        %s863 = scalar_lea.vmem [#allocation14], %s862
        // Predicated region
        $region73: #{tpu_custom_call.1} parent=51 // pred_check
          %p864 = pneg %p231
        $region74: #{tpu_custom_call.1} parent=51 // pred_check_branch
          %866 = sbr.rel (%p864) target = $region76
        $region75: #{tpu_custom_call.1} parent=51 // pred_region
          %s867 = smul.u32 2, %s35
          %s869 = ssub.s32 256, 256
          %870 = vsyncadd %s850, %s869
          %s871 = smul.addr %s867, 128
          %s872 = scalar_lea.hbm %s8, %s871
          %s873 = sshll.u32 %s853, 4
          %s874 = int_to_ptr.vmem [resolvable:$true] %s873
          %879 = dma.vmem_to_hbm [thread:$0]  %s874, 256, %s872, %s850, 128, 128, 8
        $region76: #{tpu_custom_call.1} parent=51 // pred_fallthru
          _
        // Predicated region
        $region77: #{tpu_custom_call.1} parent=51 // pred_check
          %p880 = pneg %p257
        $region78: #{tpu_custom_call.1} parent=51 // pred_check_branch
          %882 = sbr.rel (%p880) target = $region80
        $region79: #{tpu_custom_call.1} parent=51 // pred_region
          %s883 = smul.u32 2, %s35
          %s885 = ssub.s32 256, 256
          %886 = vsyncadd %s855, %s885
          %s887 = smul.addr %s883, 128
          %s888 = scalar_lea.hbm %s9, %s887
          %s889 = sshll.u32 %s858, 4
          %s890 = int_to_ptr.vmem [resolvable:$true] %s889
          %895 = dma.vmem_to_hbm [thread:$0]  %s890, 256, %s888, %s855, 128, 128, 8
        $region80: #{tpu_custom_call.1} parent=51 // pred_fallthru
          _
        // Predicated region
        $region81: #{tpu_custom_call.1} parent=51 // pred_check
          %p896 = pneg %p283
        $region82: #{tpu_custom_call.1} parent=51 // pred_check_branch
          %898 = sbr.rel (%p896) target = $region84
        $region83: #{tpu_custom_call.1} parent=51 // pred_region
          %s899 = smul.u32 2, %s35
          %s901 = ssub.s32 256, 256
          %902 = vsyncadd %s860, %s901
          %s903 = smul.addr %s899, 128
          %s904 = scalar_lea.hbm %s10, %s903
          %s905 = sshll.u32 %s863, 4
          %s906 = int_to_ptr.vmem [resolvable:$true] %s905
          %911 = dma.vmem_to_hbm [thread:$0]  %s906, 256, %s904, %s860, 128, 128, 8
        $region84: #{tpu_custom_call.1} parent=51 // pred_fallthru
          _
      $region52: #{tpu_custom_call.1} parent=5 // pred_fallthru
        _
      %p912 = scmp.le.s32.totalorder 2, %s30
      // Predicated region
      $region85: #{tpu_custom_call.1} parent=5 // pred_check
        %p913 = pneg %p912
      $region86: #{tpu_custom_call.1} parent=5 // pred_check_branch
        %915 = sbr.rel (%p913) target = $region88
      $region87: #{tpu_custom_call.1} parent=5 // pred_region
        %s916 = ssub.s32 %s30, 2
        // Predicated region
        $region89: #{tpu_custom_call.1} parent=87 // pred_check
          %p917 = pneg %p237
        $region90: #{tpu_custom_call.1} parent=87 // pred_check_branch
          %919 = sbr.rel (%p917) target = $region92
        $region91: #{tpu_custom_call.1} parent=87 // pred_region
          %s920 = sand.u32 %s222, 1
          %s921 = scalar_lea.sflag [#allocation4], %s920
          %s922 = sand.u32 %s222, 1
          %s923 = smul.addr %s922, 16
          %s924 = scalar_lea.vmem [#allocation11], %s923
          %925 = dma.done %s921, 256
        $region92: #{tpu_custom_call.1} parent=87 // pred_fallthru
          _
        // Predicated region
        $region93: #{tpu_custom_call.1} parent=87 // pred_check
          %p926 = pneg %p263
        $region94: #{tpu_custom_call.1} parent=87 // pred_check_branch
          %928 = sbr.rel (%p926) target = $region96
        $region95: #{tpu_custom_call.1} parent=87 // pred_region
          %s929 = sand.u32 %s36, 1
          %s930 = scalar_lea.sflag [#allocation13], %s929
          %s931 = sand.u32 %s248, 1
          %s932 = smul.addr %s931, 16
          %s933 = scalar_lea.vmem [#allocation12], %s932
          %934 = dma.done %s930, 256
        $region96: #{tpu_custom_call.1} parent=87 // pred_fallthru
          _
        // Predicated region
        $region97: #{tpu_custom_call.1} parent=87 // pred_check
          %p935 = pneg %p289
        $region98: #{tpu_custom_call.1} parent=87 // pred_check_branch
          %937 = sbr.rel (%p935) target = $region100
        $region99: #{tpu_custom_call.1} parent=87 // pred_region
          %s938 = sand.u32 %s36, 1
          %s939 = scalar_lea.sflag [#allocation13], %s938
          %s940 = sand.u32 %s274, 1
          %s941 = smul.addr %s940, 16
          %s942 = scalar_lea.vmem [#allocation14], %s941
          %943 = dma.done %s939, 256
        $region100: #{tpu_custom_call.1} parent=87 // pred_fallthru
          _
      $region88: #{tpu_custom_call.1} parent=5 // pred_fallthru
        _
    $region6: #{tpu_custom_call.1} parent=1 // loop_footer
      %s34 = sadd.s32 1, %s30
    $region7: #{tpu_custom_call.1} parent=1 // loop_footer_branch
      %29 = sbr.rel target = $region3
    $region8: #{tpu_custom_call.1} parent=1 // loop_exit
      _
    %944 = vsyncpa [#allocation3], 1
    %s945 = scalar_lea.sflag [#allocation3], 1
    %946 = vsyncpa %s945, 1
    %947 = vsyncpa [#allocation6], 1
    %s948 = scalar_lea.sflag [#allocation6], 1
    %949 = vsyncpa %s948, 1
    %950 = vsyncpa [#allocation9], 1
    %951 = vsyncpa [#allocation4], 1
    %s952 = scalar_lea.sflag [#allocation4], 1
    %953 = vsyncpa %s952, 1
    %954 = vsyncpa [#allocation13], 1
    %s955 = scalar_lea.sflag [#allocation13], 1
    %956 = vsyncpa %s955, 1

// kernel: tpu_custom_call.1
$region0: #{tpu_custom_call.1}
  #allocation0 [shape = 'u32[]', space=smem, size = 0x4, offset = 0x4, fixed_abs, tag = 'smem constant byte address 0x4 - core index']
  #allocation1 [shape = 'u32[144,128]{1,0:T(1,128)}', space=vmem, size = 0x12000, scoped, tag = 'internal scratch']
  %s0 = inlined_call_operand.hbm [shape: f32[30,128], index: 0, kind: input, shape index: {}]
  %s1 = inlined_call_operand.hbm [shape: f32[30,128], index: 1, kind: input, shape index: {}]
  %s2 = inlined_call_operand.hbm [shape: f32[128,128], index: 2, kind: input, shape index: {}]
  %s3 = inlined_call_operand.vmem [shape: f32[1,128], index: 3, kind: input, shape index: {}]
  %s4 = inlined_call_operand.hbm [shape: f32[128,128], index: 4, kind: input, shape index: {}]
  %s5 = inlined_call_operand.vmem [shape: f32[1,128], index: 5, kind: input, shape index: {}]
  %s6 = inlined_call_operand.hbm [shape: f32[128,256], index: 6, kind: input, shape index: {}]
  %s7 = inlined_call_operand.vmem [shape: f32[1,256], index: 7, kind: input, shape index: {}]
  %s8 = inlined_call_operand.hbm [shape: f32[30,128], index: 8, kind: output, shape index: {0}]
  %s9 = inlined_call_operand.hbm [shape: f32[30,128], index: 9, kind: output, shape index: {1}]
  %s10 = inlined_call_operand.hbm [shape: f32[30,128], index: 10, kind: output, shape index: {2}]
  %11 = xla_tuple %s8, %s9, %s10
  %s12 = sld [smem:[#allocation0]]
  $region101: #{tpu_custom_call.1} parent=0
    _
  %s14 = ssub.s32 1, %s12
  %s15 = scalar_select 0, %s14, %s12
  $region1: #{tpu_custom_call.1} parent=0
    #allocation2 [shape = 'u8[16384]{0}', space=vmem, size = 0x4000, scoped, tag = 'input window, operand 0']
    #allocation3 [shape = 's32[2]{0}', space=sflag, size = 0x8, scoped, tag = 'scoped memory for tpu_custom_call.1']
    #allocation4 [shape = 's32[2]{0}', space=sflag, size = 0x8, scoped, tag = 'scoped memory for tpu_custom_call.1']
    #allocation5 [shape = 'u8[16384]{0}', space=vmem, size = 0x4000, scoped, tag = 'input window, operand 1']
    #allocation6 [shape = 's32[2]{0}', space=sflag, size = 0x8, scoped, tag = 'scoped memory for tpu_custom_call.1']
    #allocation7 [shape = 'u8[65536]{0}', space=vmem, size = 0x10000, scoped, tag = 'input window, operand 2, single buffered']
    #allocation8 [shape = 'u8[65536]{0}', space=vmem, size = 0x10000, scoped, tag = 'input window, operand 4, single buffered']
    #allocation9 [shape = 's32[1]{0}', space=sflag, size = 0x4, scoped, tag = 'scoped memory for tpu_custom_call.1']
    #allocation10 [shape = 'u8[131072]{0}', space=vmem, size = 0x20000, scoped, tag = 'input window, operand 6, single buffered']
    #allocation11 [shape = 'u8[16384]{0}', space=vmem, size = 0x4000, scoped, tag = 'output window, operand 0']
    #allocation12 [shape = 'u8[16384]{0}', space=vmem, size = 0x4000, scoped, tag = 'output window, operand 1']
    #allocation13 [shape = 's32[2]{0}', space=sflag, size = 0x8, scoped, tag = 'scoped memory for tpu_custom_call.1']
    #allocation14 [shape = 'u8[16384]{0}', space=vmem, size = 0x4000, scoped, tag = 'output window, operand 2']
    %16 = vsyncpa [#allocation3], 0
    %s17 = scalar_lea.sflag [#allocation3], 1
    %18 = vsyncpa %s17, 0
    %19 = vsyncpa [#allocation6], 0
    %s20 = scalar_lea.sflag [#allocation6], 1
    %21 = vsyncpa %s20, 0
    %22 = vsyncpa [#allocation9], 0
    %23 = vsyncpa [#allocation4], 0
    %s24 = scalar_lea.sflag [#allocation4], 1
    %25 = vsyncpa %s24, 0
    %26 = vsyncpa [#allocation13], 0
    %s27 = scalar_lea.sflag [#allocation13], 1
    %28 = vsyncpa %s27, 0
    loop: start=0, step=1, limit=4
    $region2: #{tpu_custom_call.1} parent=1 // loop_pre_header
      _
    $region3: #{tpu_custom_call.1} parent=1 // loop_header
      %s30 = sphi 0, %s34
      %p31 = scmp.ge.s32.totalorder %s30, 4
      %s40 = sphi 0, %s42
      %s43 = sphi 0, %s40
      %s44 = sphi 0, %s43
      %s60 = sphi 0, %s44
      %s66 = sphi 0, %s68
      %s69 = sphi 0, %s66
      %s70 = sphi 0, %s69
      %s86 = sphi 0, %s70
      %s90 = sphi 0, %s90
      %s92 = sphi 0, %s90
      %s93 = sphi 0, %s92
      %s107 = sphi 0, %s93
      %s111 = sphi 0, %s111
      %s113 = sphi 0, %s111
      %s114 = sphi 0, %s113
      %s128 = sphi 0, %s114
      %s132 = sphi 0, %s132
      %s134 = sphi 0, %s132
      %s135 = sphi 0, %s134
      %s149 = sphi 0, %s135
      %s153 = sphi 0, %s153
      %s155 = sphi 0, %s153
      %s156 = sphi 0, %s155
      %s170 = sphi 0, %s156
      %s174 = sphi 0, %s174
      %s176 = sphi 0, %s174
      %s177 = sphi 0, %s176
      %s191 = sphi 0, %s177
      %s195 = sphi 0, %s195
      %s197 = sphi 0, %s195
      %s198 = sphi 0, %s197
      %s212 = sphi 0, %s198
      %s218 = sphi 0, %s220
      %s221 = sphi 0, %s218
      %s222 = sphi 0, %s221
      %s238 = sphi 0, %s222
      %s244 = sphi 0, %s246
      %s247 = sphi 0, %s244
      %s248 = sphi 0, %s247
      %s264 = sphi 0, %s248
      %s270 = sphi 0, %s272
      %s273 = sphi 0, %s270
      %s274 = sphi 0, %s273
      %s290 = sphi 0, %s274
    $region4: #{tpu_custom_call.1} parent=1 // loop_header_branch
      %33 = sbr.rel (%p31) target = $region8
    $region5: #{tpu_custom_call.1} parent=1 // loop_body
      %s35 = ssub.s32 %s30, 1
      %s36 = ssub.s32 %s30, 2
      %s37 = sadd.s32 %s30, 1
      %s38 = ssub.s32 %s30, %s37
      %p39 = scmp.eq.s32.totalorder %s38, 0
      %s41 = sadd.s32 %s40, 1
      %s42 = scalar_select %p39, %s40, %s41
      %p45 = pneg %p39
      %p46 = scmp.eq.s32.totalorder %s30, 1
      %p47 = por %p45, %p46
      %p48 = scmp.ne.s32.totalorder %s40, %s43
      %p49 = scmp.eq.s32.totalorder %s30, 0
      %p50 = por %p48, %p49
      %p51 = scmp.ne.s32.totalorder %s40, %s43
      %p52 = scmp.eq.s32.totalorder %s35, 1
      %p53 = por %p51, %p52
      %p54 = scmp.ne.s32.totalorder %s43, %s44
      %p55 = scmp.eq.s32.totalorder %s35, 0
      %p56 = por %p54, %p55
      %p57 = scmp.ne.s32.totalorder %s43, %s44
      %p58 = scmp.eq.s32.totalorder %s36, 1
      %p59 = por %p57, %p58
      %p61 = scmp.ne.s32.totalorder %s44, %s60
      %p62 = scmp.eq.s32.totalorder %s36, 0
      %p63 = por %p61, %p62
      %s64 = ssub.s32 %s30, %s37
      %p65 = scmp.eq.s32.totalorder %s64, 0
      %s67 = sadd.s32 %s66, 1
      %s68 = scalar_select %p65, %s66, %s67
      %p71 = pneg %p65
      %p72 = scmp.eq.s32.totalorder %s30, 1
      %p73 = por %p71, %p72
      %p74 = scmp.ne.s32.totalorder %s66, %s69
      %p75 = scmp.eq.s32.totalorder %s30, 0
      %p76 = por %p74, %p75
      %p77 = scmp.ne.s32.totalorder %s66, %s69
      %p78 = scmp.eq.s32.totalorder %s35, 1
      %p79 = por %p77, %p78
      %p80 = scmp.ne.s32.totalorder %s69, %s70
      %p81 = scmp.eq.s32.totalorder %s35, 0
      %p82 = por %p80, %p81
      %p83 = scmp.ne.s32.totalorder %s69, %s70
      %p84 = scmp.eq.s32.totalorder %s36, 1
      %p85 = por %p83, %p84
      %p87 = scmp.ne.s32.totalorder %s70, %s86
      %p88 = scmp.eq.s32.totalorder %s36, 0
      %p89 = por %p87, %p88
      %s91 = sadd.s32 %s90, 1
      %p94 = scmp.eq.s32.totalorder %s30, 1
      %p95 = scmp.ne.s32.totalorder %s90, %s92
      %p96 = scmp.eq.s32.totalorder %s30, 0
      %p97 = por %p95, %p96
      %p98 = scmp.ne.s32.totalorder %s90, %s92
      %p99 = scmp.eq.s32.totalorder %s35, 1
      %p100 = por %p98, %p99
      %p101 = scmp.ne.s32.totalorder %s92, %s93
      %p102 = scmp.eq.s32.totalorder %s35, 0
      %p103 = por %p101, %p102
      %p104 = scmp.ne.s32.totalorder %s92, %s93
      %p105 = scmp.eq.s32.totalorder %s36, 1
      %p106 = por %p104, %p105
      %p108 = scmp.ne.s32.totalorder %s93, %s107
      %p109 = scmp.eq.s32.totalorder %s36, 0
      %p110 = por %p108, %p109
      %s112 = sadd.s32 %s111, 1
      %p115 = scmp.eq.s32.totalorder %s30, 1
      %p116 = scmp.ne.s32.totalorder %s111, %s113
      %p117 = scmp.eq.s32.totalorder %s30, 0
      %p118 = por %p116, %p117
      %p119 = scmp.ne.s32.totalorder %s111, %s113
      %p120 = scmp.eq.s32.totalorder %s35, 1
      %p121 = por %p119, %p120
      %p122 = scmp.ne.s32.totalorder %s113, %s114
      %p123 = scmp.eq.s32.totalorder %s35, 0
      %p124 = por %p122, %p123
      %p125 = scmp.ne.s32.totalorder %s113, %s114
      %p126 = scmp.eq.s32.totalorder %s36, 1
      %p127 = por %p125, %p126
      %p129 = scmp.ne.s32.totalorder %s114, %s128
      %p130 = scmp.eq.s32.totalorder %s36, 0
      %p131 = por %p129, %p130
      %s133 = sadd.s32 %s132, 1
      %p136 = scmp.eq.s32.totalorder %s30, 1
      %p137 = scmp.ne.s32.totalorder %s132, %s134
      %p138 = scmp.eq.s32.totalorder %s30, 0
      %p139 = por %p137, %p138
      %p140 = scmp.ne.s32.totalorder %s132, %s134
      %p141 = scmp.eq.s32.totalorder %s35, 1
      %p142 = por %p140, %p141
      %p143 = scmp.ne.s32.totalorder %s134, %s135
      %p144 = scmp.eq.s32.totalorder %s35, 0
      %p145 = por %p143, %p144
      %p146 = scmp.ne.s32.totalorder %s134, %s135
      %p147 = scmp.eq.s32.totalorder %s36, 1
      %p148 = por %p146, %p147
      %p150 = scmp.ne.s32.totalorder %s135, %s149
      %p151 = scmp.eq.s32.totalorder %s36, 0
      %p152 = por %p150, %p151
      %s154 = sadd.s32 %s153, 1
      %p157 = scmp.eq.s32.totalorder %s30, 1
      %p158 = scmp.ne.s32.totalorder %s153, %s155
      %p159 = scmp.eq.s32.totalorder %s30, 0
      %p160 = por %p158, %p159
      %p161 = scmp.ne.s32.totalorder %s153, %s155
      %p162 = scmp.eq.s32.totalorder %s35, 1
      %p163 = por %p161, %p162
      %p164 = scmp.ne.s32.totalorder %s155, %s156
      %p165 = scmp.eq.s32.totalorder %s35, 0
      %p166 = por %p164, %p165
      %p167 = scmp.ne.s32.totalorder %s155, %s156
      %p168 = scmp.eq.s32.totalorder %s36, 1
      %p169 = por %p167, %p168
      %p171 = scmp.ne.s32.totalorder %s156, %s170
      %p172 = scmp.eq.s32.totalorder %s36, 0
      %p173 = por %p171, %p172
      %s175 = sadd.s32 %s174, 1
      %p178 = scmp.eq.s32.totalorder %s30, 1
      %p179 = scmp.ne.s32.totalorder %s174, %s176
      %p180 = scmp.eq.s32.totalorder %s30, 0
      %p181 = por %p179, %p180
      %p182 = scmp.ne.s32.totalorder %s174, %s176
      %p183 = scmp.eq.s32.totalorder %s35, 1
      %p184 = por %p182, %p183
      %p185 = scmp.ne.s32.totalorder %s176, %s177
      %p186 = scmp.eq.s32.totalorder %s35, 0
      %p187 = por %p185, %p186
      %p188 = scmp.ne.s32.totalorder %s176, %s177
      %p189 = scmp.eq.s32.totalorder %s36, 1
      %p190 = por %p188, %p189
      %p192 = scmp.ne.s32.totalorder %s177, %s191
      %p193 = scmp.eq.s32.totalorder %s36, 0
      %p194 = por %p192, %p193
      %s196 = sadd.s32 %s195, 1
      %p199 = scmp.eq.s32.totalorder %s30, 1
      %p200 = scmp.ne.s32.totalorder %s195, %s197
      %p201 = scmp.eq.s32.totalorder %s30, 0
      %p202 = por %p200, %p201
      %p203 = scmp.ne.s32.totalorder %s195, %s197
      %p204 = scmp.eq.s32.totalorder %s35, 1
      %p205 = por %p203, %p204
      %p206 = scmp.ne.s32.totalorder %s197, %s198
      %p207 = scmp.eq.s32.totalorder %s35, 0
      %p208 = por %p206, %p207
      %p209 = scmp.ne.s32.totalorder %s197, %s198
      %p210 = scmp.eq.s32.totalorder %s36, 1
      %p211 = por %p209, %p210
      %p213 = scmp.ne.s32.totalorder %s198, %s212
      %p214 = scmp.eq.s32.totalorder %s36, 0
      %p215 = por %p213, %p214
      %s216 = ssub.s32 %s30, %s37
      %p217 = scmp.eq.s32.totalorder %s216, 0
      %s219 = sadd.s32 %s218, 1
      %s220 = scalar_select %p217, %s218, %s219
      %p223 = pneg %p217
      %p224 = scmp.eq.s32.totalorder %s30, 1
      %p225 = por %p223, %p224
      %p226 = scmp.ne.s32.totalorder %s218, %s221
      %p227 = scmp.eq.s32.totalorder %s30, 0
      %p228 = por %p226, %p227
      %p229 = scmp.ne.s32.totalorder %s218, %s221
      %p230 = scmp.eq.s32.totalorder %s35, 1
      %p231 = por %p229, %p230
      %p232 = scmp.ne.s32.totalorder %s221, %s222
      %p233 = scmp.eq.s32.totalorder %s35, 0
      %p234 = por %p232, %p233
      %p235 = scmp.ne.s32.totalorder %s221, %s222
      %p236 = scmp.eq.s32.totalorder %s36, 1
      %p237 = por %p235, %p236
      %p239 = scmp.ne.s32.totalorder %s222, %s238
      %p240 = scmp.eq.s32.totalorder %s36, 0
      %p241 = por %p239, %p240
      %s242 = ssub.s32 %s30, %s37
      %p243 = scmp.eq.s32.totalorder %s242, 0
      %s245 = sadd.s32 %s244, 1
      %s246 = scalar_select %p243, %s244, %s245
      %p249 = pneg %p243
      %p250 = scmp.eq.s32.totalorder %s30, 1
      %p251 = por %p249, %p250
      %p252 = scmp.ne.s32.totalorder %s244, %s247
      %p253 = scmp.eq.s32.totalorder %s30, 0
      %p254 = por %p252, %p253
      %p255 = scmp.ne.s32.totalorder %s244, %s247
      %p256 = scmp.eq.s32.totalorder %s35, 1
      %p257 = por %p255, %p256
      %p258 = scmp.ne.s32.totalorder %s247, %s248
      %p259 = scmp.eq.s32.totalorder %s35, 0
      %p260 = por %p258, %p259
      %p261 = scmp.ne.s32.totalorder %s247, %s248
      %p262 = scmp.eq.s32.totalorder %s36, 1
      %p263 = por %p261, %p262
      %p265 = scmp.ne.s32.totalorder %s248, %s264
      %p266 = scmp.eq.s32.totalorder %s36, 0
      %p267 = por %p265, %p266
      %s268 = ssub.s32 %s30, %s37
      %p269 = scmp.eq.s32.totalorder %s268, 0
      %s271 = sadd.s32 %s270, 1
      %s272 = scalar_select %p269, %s270, %s271
      %p275 = pneg %p269
      %p276 = scmp.eq.s32.totalorder %s30, 1
      %p277 = por %p275, %p276
      %p278 = scmp.ne.s32.totalorder %s270, %s273
      %p279 = scmp.eq.s32.totalorder %s30, 0
      %p280 = por %p278, %p279
      %p281 = scmp.ne.s32.totalorder %s270, %s273
      %p282 = scmp.eq.s32.totalorder %s35, 1
      %p283 = por %p281, %p282
      %p284 = scmp.ne.s32.totalorder %s273, %s274
      %p285 = scmp.eq.s32.totalorder %s35, 0
      %p286 = por %p284, %p285
      %p287 = scmp.ne.s32.totalorder %s273, %s274
      %p288 = scmp.eq.s32.totalorder %s36, 1
      %p289 = por %p287, %p288
      %p291 = scmp.ne.s32.totalorder %s274, %s290
      %p292 = scmp.eq.s32.totalorder %s36, 0
      %p293 = por %p291, %p292
      %p294 = scmp.le.s32.totalorder 1, %s30
      %p295 = scmp.lt.s32.totalorder %s30, 3
      %p296 = pnand %p294, %p295
      %p297 = pneg %p296
      // Predicated region
      $region9: #{tpu_custom_call.1} parent=5 // pred_check
        _
      $region10: #{tpu_custom_call.1} parent=5 // pred_check_branch
        %299 = sbr.rel (%p296) target = $region12
      $region11: #{tpu_custom_call.1} parent=5 // pred_region
        %s300 = ssub.s32 %s30, 1
        // Predicated region
        $region13: #{tpu_custom_call.1} parent=11 // pred_check
          %p301 = pneg %p103
        $region14: #{tpu_custom_call.1} parent=11 // pred_check_branch
          %303 = sbr.rel (%p301) target = $region16
        $region15: #{tpu_custom_call.1} parent=11 // pred_region
          %s305 = ssub.s32 2048, 2048
          %306 = vsyncadd [#allocation6], %s305
          %s307 = sshll.u32 [#allocation7], 4
          %s308 = int_to_ptr.vmem [resolvable:$true] %s307
          %313 = dma.hbm_to_vmem [thread:$0]  %s2, 2048, %s308, [#allocation6], 128, 128, 8
        $region16: #{tpu_custom_call.1} parent=11 // pred_fallthru
          _
        // Predicated region
        $region17: #{tpu_custom_call.1} parent=11 // pred_check
          %p314 = pneg %p124
        $region18: #{tpu_custom_call.1} parent=11 // pred_check_branch
          %316 = sbr.rel (%p314) target = $region20
        $region19: #{tpu_custom_call.1} parent=11 // pred_region
          _
        $region20: #{tpu_custom_call.1} parent=11 // pred_fallthru
          _
        // Predicated region
        $region21: #{tpu_custom_call.1} parent=11 // pred_check
          %p317 = pneg %p145
        $region22: #{tpu_custom_call.1} parent=11 // pred_check_branch
          %319 = sbr.rel (%p317) target = $region24
        $region23: #{tpu_custom_call.1} parent=11 // pred_region
          %s321 = ssub.s32 2048, 2048
          %322 = vsyncadd [#allocation9], %s321
          %s323 = sshll.u32 [#allocation8], 4
          %s324 = int_to_ptr.vmem [resolvable:$true] %s323
          %329 = dma.hbm_to_vmem [thread:$0]  %s4, 2048, %s324, [#allocation9], 128, 128, 8
        $region24: #{tpu_custom_call.1} parent=11 // pred_fallthru
          _
        // Predicated region
        $region25: #{tpu_custom_call.1} parent=11 // pred_check
          %p330 = pneg %p166
        $region26: #{tpu_custom_call.1} parent=11 // pred_check_branch
          %332 = sbr.rel (%p330) target = $region28
        $region27: #{tpu_custom_call.1} parent=11 // pred_region
          _
        $region28: #{tpu_custom_call.1} parent=11 // pred_fallthru
          _
        // Predicated region
        $region29: #{tpu_custom_call.1} parent=11 // pred_check
          %p333 = pneg %p187
        $region30: #{tpu_custom_call.1} parent=11 // pred_check_branch
          %335 = sbr.rel (%p333) target = $region32
        $region31: #{tpu_custom_call.1} parent=11 // pred_region
          %s337 = ssub.s32 4096, 4096
          %338 = vsyncadd [#allocation9], %s337
          %s339 = sshll.u32 [#allocation10], 4
          %s340 = int_to_ptr.vmem [resolvable:$true] %s339
          %345 = dma.hbm_to_vmem [thread:$0]  %s6, 4096, %s340, [#allocation9], 256, 256, 16
        $region32: #{tpu_custom_call.1} parent=11 // pred_fallthru
          _
        // Predicated region
        $region33: #{tpu_custom_call.1} parent=11 // pred_check
          %p346 = pneg %p208
        $region34: #{tpu_custom_call.1} parent=11 // pred_check_branch
          %348 = sbr.rel (%p346) target = $region36
        $region35: #{tpu_custom_call.1} parent=11 // pred_region
          _
        $region36: #{tpu_custom_call.1} parent=11 // pred_fallthru
          _
      $region12: #{tpu_custom_call.1} parent=5 // pred_fallthru
        _
      %p349 = scmp.lt.s32.totalorder %s30, 2
      // Predicated region
      $region37: #{tpu_custom_call.1} parent=5 // pred_check
        %p350 = pneg %p349
      $region38: #{tpu_custom_call.1} parent=5 // pred_check_branch
        %352 = sbr.rel (%p350) target = $region40
      $region39: #{tpu_custom_call.1} parent=5 // pred_region
        // Predicated region
        $region41: #{tpu_custom_call.1} parent=39 // pred_check
          %p353 = pneg %p50
        $region42: #{tpu_custom_call.1} parent=39 // pred_check_branch
          %355 = sbr.rel (%p353) target = $region44
        $region43: #{tpu_custom_call.1} parent=39 // pred_region
          %s356 = sand.u32 %s40, 1
          %s357 = scalar_lea.sflag [#allocation3], %s356
          %s358 = sand.u32 %s40, 1
          %s359 = smul.addr %s358, 16
          %s360 = scalar_lea.vmem [#allocation2], %s359
          %s361 = smul.u32 2, %s30
          %s363 = ssub.s32 256, 256
          %364 = vsyncadd %s357, %s363
          %s365 = smul.addr %s361, 128
          %s366 = scalar_lea.hbm %s0, %s365
          %s367 = sshll.u32 %s360, 4
          %s368 = int_to_ptr.vmem [resolvable:$true] %s367
          %373 = dma.hbm_to_vmem [thread:$0]  %s366, 256, %s368, %s357, 128, 128, 8
        $region44: #{tpu_custom_call.1} parent=39 // pred_fallthru
          _
        // Predicated region
        $region45: #{tpu_custom_call.1} parent=39 // pred_check
          %p374 = pneg %p76
        $region46: #{tpu_custom_call.1} parent=39 // pred_check_branch
          %376 = sbr.rel (%p374) target = $region48
        $region47: #{tpu_custom_call.1} parent=39 // pred_region
          %s377 = sand.u32 %s30, 1
          %s378 = scalar_lea.sflag [#allocation6], %s377
          %s379 = sand.u32 %s66, 1
          %s380 = smul.addr %s379, 16
          %s381 = scalar_lea.vmem [#allocation5], %s380
          %s382 = smul.u32 2, %s30
          %s384 = ssub.s32 256, 256
          %385 = vsyncadd %s378, %s384
          %s386 = smul.addr %s382, 128
          %s387 = scalar_lea.hbm %s1, %s386
          %s388 = sshll.u32 %s381, 4
          %s389 = int_to_ptr.vmem [resolvable:$true] %s388
          %394 = dma.hbm_to_vmem [thread:$0]  %s387, 256, %s389, %s378, 128, 128, 8
        $region48: #{tpu_custom_call.1} parent=39 // pred_fallthru
          _
      $region40: #{tpu_custom_call.1} parent=5 // pred_fallthru
        _
      %p395 = scmp.le.s32.totalorder 1, %s30
      %p396 = scmp.lt.s32.totalorder %s30, 3
      %p397 = pnand %p395, %p396
      %p398 = pneg %p397
      // Predicated region
      $region49: #{tpu_custom_call.1} parent=5 // pred_check
        _
      $region50: #{tpu_custom_call.1} parent=5 // pred_check_branch
        %400 = sbr.rel (%p397) target = $region52
      $region51: #{tpu_custom_call.1} parent=5 // pred_region
        %s401 = ssub.s32 %s30, 1
        %s402 = sand.u32 %s43, 1
        %s403 = scalar_lea.sflag [#allocation3], %s402
        %s404 = sand.u32 %s43, 1
        %s405 = smul.addr %s404, 16
        %s406 = scalar_lea.vmem [#allocation2], %s405
        // Predicated region
        $region53: #{tpu_custom_call.1} parent=51 // pred_check
          %p407 = pneg %p56
        $region54: #{tpu_custom_call.1} parent=51 // pred_check_branch
          %409 = sbr.rel (%p407) target = $region56
        $region55: #{tpu_custom_call.1} parent=51 // pred_region
          %410 = dma.done %s403, 256
        $region56: #{tpu_custom_call.1} parent=51 // pred_fallthru
          _
        %s411 = sand.u32 %s35, 1
        %s412 = scalar_lea.sflag [#allocation6], %s411
        %s413 = sand.u32 %s69, 1
        %s414 = smul.addr %s413, 16
        %s415 = scalar_lea.vmem [#allocation5], %s414
        // Predicated region
        $region57: #{tpu_custom_call.1} parent=51 // pred_check
          %p416 = pneg %p82
        $region58: #{tpu_custom_call.1} parent=51 // pred_check_branch
          %418 = sbr.rel (%p416) target = $region60
        $region59: #{tpu_custom_call.1} parent=51 // pred_region
          %419 = dma.done %s412, 256
        $region60: #{tpu_custom_call.1} parent=51 // pred_fallthru
          _
        // Predicated region
        $region61: #{tpu_custom_call.1} parent=51 // pred_check
          %p420 = pneg %p103
        $region62: #{tpu_custom_call.1} parent=51 // pred_check_branch
          %422 = sbr.rel (%p420) target = $region64
        $region63: #{tpu_custom_call.1} parent=51 // pred_region
          %423 = dma.done [#allocation6], 2048
        $region64: #{tpu_custom_call.1} parent=51 // pred_fallthru
          _
        // Predicated region
        $region65: #{tpu_custom_call.1} parent=51 // pred_check
          %p424 = pneg %p145
        $region66: #{tpu_custom_call.1} parent=51 // pred_check_branch
          %426 = sbr.rel (%p424) target = $region68
        $region67: #{tpu_custom_call.1} parent=51 // pred_region
          %427 = dma.done [#allocation9], 2048
        $region68: #{tpu_custom_call.1} parent=51 // pred_fallthru
          _
        // Predicated region
        $region69: #{tpu_custom_call.1} parent=51 // pred_check
          %p428 = pneg %p187
        $region70: #{tpu_custom_call.1} parent=51 // pred_check_branch
          %430 = sbr.rel (%p428) target = $region72
        $region71: #{tpu_custom_call.1} parent=51 // pred_region
          %431 = dma.done [#allocation9], 4096
        $region72: #{tpu_custom_call.1} parent=51 // pred_fallthru
          _
        %s432 = sand.u32 %s43, 1
        %s433 = scalar_lea.sflag [#allocation3], %s432
        %s434 = sand.u32 %s43, 1
        %s435 = smul.addr %s434, 16
        %s436 = scalar_lea.vmem [#allocation2], %s435
        %p437 = pneg %p56
        %p438 = pneg %p53
        %s439 = sand.u32 %s35, 1
        %s440 = scalar_lea.sflag [#allocation6], %s439
        %s441 = sand.u32 %s69, 1
        %s442 = smul.addr %s441, 16
        %s443 = scalar_lea.vmem [#allocation5], %s442
        %p444 = pneg %p82
        %p445 = pneg %p79
        %p446 = pneg %p103
        %p447 = pneg %p100
        %p448 = pneg %p124
        %p449 = pneg %p121
        %p450 = pneg %p145
        %p451 = pneg %p142
        %p452 = pneg %p166
        %p453 = pneg %p163
        %p454 = pneg %p187
        %p455 = pneg %p184
        %p456 = pneg %p208
        %p457 = pneg %p205
        %p458 = pneg %p234
        %p459 = pneg %p231
        %s460 = sand.u32 %s221, 1
        %s461 = scalar_lea.sflag [#allocation4], %s460
        %s462 = sand.u32 %s221, 1
        %s463 = smul.addr %s462, 16
        %s464 = scalar_lea.vmem [#allocation11], %s463
        %p465 = pneg %p260
        %p466 = pneg %p257
        %s467 = sand.u32 %s35, 1
        %s468 = scalar_lea.sflag [#allocation13], %s467
        %s469 = sand.u32 %s247, 1
        %s470 = smul.addr %s469, 16
        %s471 = scalar_lea.vmem [#allocation12], %s470
        %p472 = pneg %p286
        %p473 = pneg %p283
        %s474 = sand.u32 %s35, 1
        %s475 = scalar_lea.sflag [#allocation13], %s474
        %s476 = sand.u32 %s273, 1
        %s477 = smul.addr %s476, 16
        %s478 = scalar_lea.vmem [#allocation14], %s477
        %s479 = smul.u32 2, %s35
        %s480 = smul.u32 2, %s35
        %s481 = smul.u32 2, %s35
        %s482 = smul.u32 2, %s35
        %s483 = smul.u32 2, %s35
        %v484 = vld [vmem:[%s406] sm:$0xff]
        %v485 = vld [vmem:[%s406 + $0x8] sm:$0xff]
        %v486 = vld [vmem:[%s415] sm:$0xff]
        %v487 = vld [vmem:[%s415 + $0x8] sm:$0xff]
        %v488 = vld [vmem:[#allocation7] sm:$0xff]
        %v489 = vld [vmem:[#allocation7 + $0x8] sm:$0xff]
        %v490 = vld [vmem:[#allocation7 + $0x10] sm:$0xff]
        %v491 = vld [vmem:[#allocation7 + $0x18] sm:$0xff]
        %v492 = vld [vmem:[#allocation7 + $0x20] sm:$0xff]
        %v493 = vld [vmem:[#allocation7 + $0x28] sm:$0xff]
        %v494 = vld [vmem:[#allocation7 + $0x30] sm:$0xff]
        %v495 = vld [vmem:[#allocation7 + $0x38] sm:$0xff]
        %v496 = vld [vmem:[#allocation7 + $0x40] sm:$0xff]
        %v497 = vld [vmem:[#allocation7 + $0x48] sm:$0xff]
        %v498 = vld [vmem:[#allocation7 + $0x50] sm:$0xff]
        %v499 = vld [vmem:[#allocation7 + $0x58] sm:$0xff]
        %v500 = vld [vmem:[#allocation7 + $0x60] sm:$0xff]
        %v501 = vld [vmem:[#allocation7 + $0x68] sm:$0xff]
        %v502 = vld [vmem:[#allocation7 + $0x70] sm:$0xff]
        %v503 = vld [vmem:[#allocation7 + $0x78] sm:$0xff]
        %v504 = vld [vmem:[%s3] sm:$0x1]
        %v506 = vlaneseq
        %v507 = vshrl.u32 %v506, 7
        %v508 = vsub.s32 0, %v507
        %v509 = vrot.slane %v504, %v508
        %511 = vmatprep.subr.mxu0 0.0
        %512 = vmatpush1.msra.mxu0 %v488
        %513 = vmatprep.subr.mxu0 0.0
        %514 = vmatpush1.msra.mxu0 %v489
        %515 = vmatprep.subr.mxu0 0.0
        %516 = vmatpush1.msra.mxu0 %v490
        %517 = vmatprep.subr.mxu0 0.0
        %518 = vmatpush1.msra.mxu0 %v491
        %519 = vmatprep.subr.mxu0 0.0
        %520 = vmatpush1.msra.mxu0 %v492
        %521 = vmatprep.subr.mxu0 0.0
        %522 = vmatpush1.msra.mxu0 %v493
        %523 = vmatprep.subr.mxu0 0.0
        %524 = vmatpush1.msra.mxu0 %v494
        %525 = vmatprep.subr.mxu0 0.0
        %526 = vmatpush1.msra.mxu0 %v495
        %527 = vmatprep.subr.mxu0 0.0
        %528 = vmatpush1.msra.mxu0 %v496
        %529 = vmatprep.subr.mxu0 0.0
        %530 = vmatpush1.msra.mxu0 %v497
        %531 = vmatprep.subr.mxu0 0.0
        %532 = vmatpush1.msra.mxu0 %v498
        %533 = vmatprep.subr.mxu0 0.0
        %534 = vmatpush1.msra.mxu0 %v499
        %535 = vmatprep.subr.mxu0 0.0
        %536 = vmatpush1.msra.mxu0 %v500
        %537 = vmatprep.subr.mxu0 0.0
        %538 = vmatpush1.msra.mxu0 %v501
        %539 = vmatprep.subr.mxu0 0.0
        %540 = vmatpush1.msra.mxu0 %v502
        %541 = vmatprep.subr.mxu0 0.0
        %542 = vmatpush1.msra.mxu0 %v503
        %543 = vmatprep.subr.mxu0 0.0
        %544 = vmatpush1.msra.mxu0 0.0
        %545 = vmatprep.subr.mxu0 0.0
        %546 = vmatpush1.msra.mxu0 0.0
        %547 = vmatprep.subr.mxu0 0.0
        %548 = vmatpush1.msra.mxu0 0.0
        %549 = vmatprep.subr.mxu0 0.0
        %550 = vmatpush1.msra.mxu0 0.0
        %551 = vmatprep.subr.mxu0 0.0
        %552 = vmatpush1.msra.mxu0 0.0
        %553 = vmatprep.subr.mxu0 0.0
        %554 = vmatpush1.msra.mxu0 0.0
        %555 = vmatprep.subr.mxu0 0.0
        %556 = vmatpush1.msra.mxu0 0.0
        %557 = vmatprep.subr.mxu0 0.0
        %558 = vmatpush1.msra.mxu0 0.0
        %559 = vmatprep.subr.mxu0 0.0
        %560 = vmatpush1.msra.mxu0 0.0
        %561 = vmatprep.subr.mxu0 0.0
        %562 = vmatpush1.msra.mxu0 0.0
        %563 = vmatprep.subr.mxu0 0.0
        %564 = vmatpush1.msra.mxu0 0.0
        %565 = vmatprep.subr.mxu0 0.0
        %566 = vmatpush1.msra.mxu0 0.0
        %567 = vmatprep.subr.mxu0 0.0
        %568 = vmatpush1.msra.mxu0 0.0
        %569 = vmatprep.subr.mxu0 0.0
        %570 = vmatpush1.msra.mxu0 0.0
        %571 = vmatprep.subr.mxu0 0.0
        %572 = vmatpush1.msra.mxu0 0.0
        %573 = vmatprep.subr.mxu0 0.0
        %574 = vmatpush1.msra.mxu0 0.0
        %575 = vmatprep.mubr.f32.mxu0 0.0
        %576 = vmatmul.mubr.f32.gmra.mrb[0].mxu0 %v484
        %v577 = vpop.f32.mrb[0].mxu0
        %v578 = vadd.f32 %v509, %v577
        %v579 = vpop.f32.mrb[0].mxu0
        %580 = vmatprep.mubr.f32.mxu0 0.0
        %581 = vmatmul.mubr.f32.gmra.mrb[0].mxu0 %v485
        %v582 = vpop.f32.mrb[0].mxu0
        %v583 = vadd.f32 %v509, %v582
        %v584 = vpop.f32.mrb[0].mxu0
        %585 = vdwg.mxu0
        %vm586 = vcmp.ge.f32.partialorder %v578, 0.0
        %vm587 = vcmp.ge.f32.partialorder %v583, 0.0
        %v588 = vmul.f32 %v578, 0.01
        %v589 = vmul.f32 %v583, 0.01
        %v590 = vsel %vm586, %v578, %v588
        %v591 = vsel %vm587, %v583, %v589
        %v592 = vld [vmem:[#allocation8] sm:$0xff]
        %v593 = vld [vmem:[#allocation8 + $0x8] sm:$0xff]
        %v594 = vld [vmem:[#allocation8 + $0x10] sm:$0xff]
        %v595 = vld [vmem:[#allocation8 + $0x18] sm:$0xff]
        %v596 = vld [vmem:[#allocation8 + $0x20] sm:$0xff]
        %v597 = vld [vmem:[#allocation8 + $0x28] sm:$0xff]
        %v598 = vld [vmem:[#allocation8 + $0x30] sm:$0xff]
        %v599 = vld [vmem:[#allocation8 + $0x38] sm:$0xff]
        %v600 = vld [vmem:[#allocation8 + $0x40] sm:$0xff]
        %v601 = vld [vmem:[#allocation8 + $0x48] sm:$0xff]
        %v602 = vld [vmem:[#allocation8 + $0x50] sm:$0xff]
        %v603 = vld [vmem:[#allocation8 + $0x58] sm:$0xff]
        %v604 = vld [vmem:[#allocation8 + $0x60] sm:$0xff]
        %v605 = vld [vmem:[#allocation8 + $0x68] sm:$0xff]
        %v606 = vld [vmem:[#allocation8 + $0x70] sm:$0xff]
        %v607 = vld [vmem:[#allocation8 + $0x78] sm:$0xff]
        %v608 = vld [vmem:[%s5] sm:$0x1]
        %v610 = vlaneseq
        %v611 = vshrl.u32 %v610, 7
        %v612 = vsub.s32 0, %v611
        %v613 = vrot.slane %v608, %v612
        %615 = vmatprep.subr.mxu0 0.0
        %616 = vmatpush1.msra.mxu0 %v592
        %617 = vmatprep.subr.mxu0 0.0
        %618 = vmatpush1.msra.mxu0 %v593
        %619 = vmatprep.subr.mxu0 0.0
        %620 = vmatpush1.msra.mxu0 %v594
        %621 = vmatprep.subr.mxu0 0.0
        %622 = vmatpush1.msra.mxu0 %v595
        %623 = vmatprep.subr.mxu0 0.0
        %624 = vmatpush1.msra.mxu0 %v596
        %625 = vmatprep.subr.mxu0 0.0
        %626 = vmatpush1.msra.mxu0 %v597
        %627 = vmatprep.subr.mxu0 0.0
        %628 = vmatpush1.msra.mxu0 %v598
        %629 = vmatprep.subr.mxu0 0.0
        %630 = vmatpush1.msra.mxu0 %v599
        %631 = vmatprep.subr.mxu0 0.0
        %632 = vmatpush1.msra.mxu0 %v600
        %633 = vmatprep.subr.mxu0 0.0
        %634 = vmatpush1.msra.mxu0 %v601
        %635 = vmatprep.subr.mxu0 0.0
        %636 = vmatpush1.msra.mxu0 %v602
        %637 = vmatprep.subr.mxu0 0.0
        %638 = vmatpush1.msra.mxu0 %v603
        %639 = vmatprep.subr.mxu0 0.0
        %640 = vmatpush1.msra.mxu0 %v604
        %641 = vmatprep.subr.mxu0 0.0
        %642 = vmatpush1.msra.mxu0 %v605
        %643 = vmatprep.subr.mxu0 0.0
        %644 = vmatpush1.msra.mxu0 %v606
        %645 = vmatprep.subr.mxu0 0.0
        %646 = vmatpush1.msra.mxu0 %v607
        %647 = vmatprep.subr.mxu0 0.0
        %648 = vmatpush1.msra.mxu0 0.0
        %649 = vmatprep.subr.mxu0 0.0
        %650 = vmatpush1.msra.mxu0 0.0
        %651 = vmatprep.subr.mxu0 0.0
        %652 = vmatpush1.msra.mxu0 0.0
        %653 = vmatprep.subr.mxu0 0.0
        %654 = vmatpush1.msra.mxu0 0.0
        %655 = vmatprep.subr.mxu0 0.0
        %656 = vmatpush1.msra.mxu0 0.0
        %657 = vmatprep.subr.mxu0 0.0
        %658 = vmatpush1.msra.mxu0 0.0
        %659 = vmatprep.subr.mxu0 0.0
        %660 = vmatpush1.msra.mxu0 0.0
        %661 = vmatprep.subr.mxu0 0.0
        %662 = vmatpush1.msra.mxu0 0.0
        %663 = vmatprep.subr.mxu0 0.0
        %664 = vmatpush1.msra.mxu0 0.0
        %665 = vmatprep.subr.mxu0 0.0
        %666 = vmatpush1.msra.mxu0 0.0
        %667 = vmatprep.subr.mxu0 0.0
        %668 = vmatpush1.msra.mxu0 0.0
        %669 = vmatprep.subr.mxu0 0.0
        %670 = vmatpush1.msra.mxu0 0.0
        %671 = vmatprep.subr.mxu0 0.0
        %672 = vmatpush1.msra.mxu0 0.0
        %673 = vmatprep.subr.mxu0 0.0
        %674 = vmatpush1.msra.mxu0 0.0
        %675 = vmatprep.subr.mxu0 0.0
        %676 = vmatpush1.msra.mxu0 0.0
        %677 = vmatprep.subr.mxu0 0.0
        %678 = vmatpush1.msra.mxu0 0.0
        %679 = vmatprep.mubr.f32.mxu0 0.0
        %680 = vmatmul.mubr.f32.gmra.mrb[0].mxu0 %v486
        %v681 = vpop.f32.mrb[0].mxu0
        %v682 = vadd.f32 %v613, %v681
        %v683 = vpop.f32.mrb[0].mxu0
        %684 = vmatprep.mubr.f32.mxu0 0.0
        %685 = vmatmul.mubr.f32.gmra.mrb[0].mxu0 %v487
        %v686 = vpop.f32.mrb[0].mxu0
        %v687 = vadd.f32 %v613, %v686
        %v688 = vpop.f32.mrb[0].mxu0
        %689 = vdwg.mxu0
        %vm690 = vcmp.ge.f32.partialorder %v682, 0.0
        %vm691 = vcmp.ge.f32.partialorder %v687, 0.0
        %v692 = vmul.f32 %v682, 0.01
        %v693 = vmul.f32 %v687, 0.01
        %v694 = vsel %vm690, %v682, %v692
        %v695 = vsel %vm691, %v687, %v693
        %v696 = vadd.f32 %v590, %v694
        %v697 = vadd.f32 %v591, %v695
        %v698 = vmul.f32 %v696, %v696
        %v699 = vmul.f32 %v697, %v697
        %700 = vadd.xlane.f32.xlu0 %v698
        %v701 = vpop.xlane.xlu0 %700
        %702 = vadd.xlane.f32.xlu0 %v699
        %v703 = vpop.xlane.xlu0 %702
        %v704 = vmax.f32 %v701, 1e-24
        %v705 = vmax.f32 %v703, 1e-24
        %v706 = vrsqrt.pop %v704
        %v707 = vrsqrt.pop %v705
        %v708 = vmul.f32 %v696, %v706
        %v709 = vmul.f32 %v697, %v707
        %710 = vst [vmem:[%s478] sm:$0xff] %v708
        %711 = vst [vmem:[%s478 + $0x8] sm:$0xff] %v709
        %v712 = vld [vmem:[#allocation10] sm:$0xff]
        %v713 = vld [vmem:[#allocation10 + $0x8] sm:$0xff]
        %v714 = vld [vmem:[#allocation10 + $0x10] sm:$0xff]
        %v715 = vld [vmem:[#allocation10 + $0x18] sm:$0xff]
        %v716 = vld [vmem:[#allocation10 + $0x20] sm:$0xff]
        %v717 = vld [vmem:[#allocation10 + $0x28] sm:$0xff]
        %v718 = vld [vmem:[#allocation10 + $0x30] sm:$0xff]
        %v719 = vld [vmem:[#allocation10 + $0x38] sm:$0xff]
        %v720 = vld [vmem:[#allocation10 + $0x40] sm:$0xff]
        %v721 = vld [vmem:[#allocation10 + $0x48] sm:$0xff]
        %v722 = vld [vmem:[#allocation10 + $0x50] sm:$0xff]
        %v723 = vld [vmem:[#allocation10 + $0x58] sm:$0xff]
        %v724 = vld [vmem:[#allocation10 + $0x60] sm:$0xff]
        %v725 = vld [vmem:[#allocation10 + $0x68] sm:$0xff]
        %v726 = vld [vmem:[#allocation10 + $0x70] sm:$0xff]
        %v727 = vld [vmem:[#allocation10 + $0x78] sm:$0xff]
        %v728 = vld [vmem:[#allocation10 + $0x80] sm:$0xff]
        %v729 = vld [vmem:[#allocation10 + $0x88] sm:$0xff]
        %v730 = vld [vmem:[#allocation10 + $0x90] sm:$0xff]
        %v731 = vld [vmem:[#allocation10 + $0x98] sm:$0xff]
        %v732 = vld [vmem:[#allocation10 + $0xa0] sm:$0xff]
        %v733 = vld [vmem:[#allocation10 + $0xa8] sm:$0xff]
        %v734 = vld [vmem:[#allocation10 + $0xb0] sm:$0xff]
        %v735 = vld [vmem:[#allocation10 + $0xb8] sm:$0xff]
        %v736 = vld [vmem:[#allocation10 + $0xc0] sm:$0xff]
        %v737 = vld [vmem:[#allocation10 + $0xc8] sm:$0xff]
        %v738 = vld [vmem:[#allocation10 + $0xd0] sm:$0xff]
        %v739 = vld [vmem:[#allocation10 + $0xd8] sm:$0xff]
        %v740 = vld [vmem:[#allocation10 + $0xe0] sm:$0xff]
        %v741 = vld [vmem:[#allocation10 + $0xe8] sm:$0xff]
        %v742 = vld [vmem:[#allocation10 + $0xf0] sm:$0xff]
        %v743 = vld [vmem:[#allocation10 + $0xf8] sm:$0xff]
        %v744 = vld [vmem:[%s7] sm:$0x3]
        %v746 = vlaneseq
        %v747 = vshrl.u32 %v746, 7
        %v748 = vsub.s32 0, %v747
        %v749 = vrot.slane %v744, %v748
        %v750 = vlaneseq
        %v751 = vshrl.u32 %v750, 7
        %v752 = vsub.s32 1, %v751
        %v753 = vrot.slane %v744, %v752
        %756 = vmatprep.subr.mxu0 %v713
        %757 = vmatpush1.msra.mxu0 %v712
        %758 = vmatprep.subr.mxu0 %v715
        %759 = vmatpush1.msra.mxu0 %v714
        %760 = vmatprep.subr.mxu0 %v717
        %761 = vmatpush1.msra.mxu0 %v716
        %762 = vmatprep.subr.mxu0 %v719
        %763 = vmatpush1.msra.mxu0 %v718
        %764 = vmatprep.subr.mxu0 %v721
        %765 = vmatpush1.msra.mxu0 %v720
        %766 = vmatprep.subr.mxu0 %v723
        %767 = vmatpush1.msra.mxu0 %v722
        %768 = vmatprep.subr.mxu0 %v725
        %769 = vmatpush1.msra.mxu0 %v724
        %770 = vmatprep.subr.mxu0 %v727
        %771 = vmatpush1.msra.mxu0 %v726
        %772 = vmatprep.subr.mxu0 %v729
        %773 = vmatpush1.msra.mxu0 %v728
        %774 = vmatprep.subr.mxu0 %v731
        %775 = vmatpush1.msra.mxu0 %v730
        %776 = vmatprep.subr.mxu0 %v733
        %777 = vmatpush1.msra.mxu0 %v732
        %778 = vmatprep.subr.mxu0 %v735
        %779 = vmatpush1.msra.mxu0 %v734
        %780 = vmatprep.subr.mxu0 %v737
        %781 = vmatpush1.msra.mxu0 %v736
        %782 = vmatprep.subr.mxu0 %v739
        %783 = vmatpush1.msra.mxu0 %v738
        %784 = vmatprep.subr.mxu0 %v741
        %785 = vmatpush1.msra.mxu0 %v740
        %786 = vmatprep.subr.mxu0 %v743
        %787 = vmatpush1.msra.mxu0 %v742
        %788 = vmatprep.subr.mxu0 0.0
        %789 = vmatpush1.msra.mxu0 0.0
        %790 = vmatprep.subr.mxu0 0.0
        %791 = vmatpush1.msra.mxu0 0.0
        %792 = vmatprep.subr.mxu0 0.0
        %793 = vmatpush1.msra.mxu0 0.0
        %794 = vmatprep.subr.mxu0 0.0
        %795 = vmatpush1.msra.mxu0 0.0
        %796 = vmatprep.subr.mxu0 0.0
        %797 = vmatpush1.msra.mxu0 0.0
        %798 = vmatprep.subr.mxu0 0.0
        %799 = vmatpush1.msra.mxu0 0.0
        %800 = vmatprep.subr.mxu0 0.0
        %801 = vmatpush1.msra.mxu0 0.0
        %802 = vmatprep.subr.mxu0 0.0
        %803 = vmatpush1.msra.mxu0 0.0
        %804 = vmatprep.subr.mxu0 0.0
        %805 = vmatpush1.msra.mxu0 0.0
        %806 = vmatprep.subr.mxu0 0.0
        %807 = vmatpush1.msra.mxu0 0.0
        %808 = vmatprep.subr.mxu0 0.0
        %809 = vmatpush1.msra.mxu0 0.0
        %810 = vmatprep.subr.mxu0 0.0
        %811 = vmatpush1.msra.mxu0 0.0
        %812 = vmatprep.subr.mxu0 0.0
        %813 = vmatpush1.msra.mxu0 0.0
        %814 = vmatprep.subr.mxu0 0.0
        %815 = vmatpush1.msra.mxu0 0.0
        %816 = vmatprep.subr.mxu0 0.0
        %817 = vmatpush1.msra.mxu0 0.0
        %818 = vmatprep.subr.mxu0 0.0
        %819 = vmatpush1.msra.mxu0 0.0
        %820 = vmatprep.mubr.f32.mxu0 0.0
        %821 = vmatmul.mubr.f32.gmra.mrb[0].mxu0 %v708
        %v822 = vpop.f32.mrb[0].mxu0
        %v823 = vadd.f32 %v749, %v822
        %v824 = vpop.f32.mrb[0].mxu0
        %v825 = vadd.f32 %v753, %v824
        %826 = vmatprep.mubr.f32.mxu0 0.0
        %827 = vmatmul.mubr.f32.gmra.mrb[0].mxu0 %v709
        %v828 = vpop.f32.mrb[0].mxu0
        %v829 = vadd.f32 %v749, %v828
        %v830 = vpop.f32.mrb[0].mxu0
        %v831 = vadd.f32 %v753, %v830
        %832 = vdwg.mxu0
        %vm833 = vcmp.ge.f32.partialorder %v823, 0.0
        %vm834 = vcmp.ge.f32.partialorder %v825, 0.0
        %vm835 = vcmp.ge.f32.partialorder %v829, 0.0
        %vm836 = vcmp.ge.f32.partialorder %v831, 0.0
        %v837 = vmul.f32 %v823, 0.01
        %v838 = vmul.f32 %v825, 0.01
        %v839 = vmul.f32 %v829, 0.01
        %v840 = vmul.f32 %v831, 0.01
        %v841 = vsel %vm833, %v823, %v837
        %v842 = vsel %vm834, %v825, %v838
        %v843 = vsel %vm835, %v829, %v839
        %v844 = vsel %vm836, %v831, %v840
        %845 = vst [vmem:[%s464] sm:$0xff] %v841
        %846 = vst [vmem:[%s464 + $0x8] sm:$0xff] %v843
        %847 = vst [vmem:[%s471] sm:$0xff] %v842
        %848 = vst [vmem:[%s471 + $0x8] sm:$0xff] %v844
        %s849 = sand.u32 %s221, 1
        %s850 = scalar_lea.sflag [#allocation4], %s849
        %s851 = sand.u32 %s221, 1
        %s852 = smul.addr %s851, 16
        %s853 = scalar_lea.vmem [#allocation11], %s852
        %s854 = sand.u32 %s35, 1
        %s855 = scalar_lea.sflag [#allocation13], %s854
        %s856 = sand.u32 %s247, 1
        %s857 = smul.addr %s856, 16
        %s858 = scalar_lea.vmem [#allocation12], %s857
        %s859 = sand.u32 %s35, 1
        %s860 = scalar_lea.sflag [#allocation13], %s859
        %s861 = sand.u32 %s273, 1
        %s862 = smul.addr %s861, 16
        %s863 = scalar_lea.vmem [#allocation14], %s862
        // Predicated region
        $region73: #{tpu_custom_call.1} parent=51 // pred_check
          %p864 = pneg %p231
        $region74: #{tpu_custom_call.1} parent=51 // pred_check_branch
          %866 = sbr.rel (%p864) target = $region76
        $region75: #{tpu_custom_call.1} parent=51 // pred_region
          %s867 = smul.u32 2, %s35
          %s869 = ssub.s32 256, 256
          %870 = vsyncadd %s850, %s869
          %s871 = smul.addr %s867, 128
          %s872 = scalar_lea.hbm %s8, %s871
          %s873 = sshll.u32 %s853, 4
          %s874 = int_to_ptr.vmem [resolvable:$true] %s873
          %879 = dma.vmem_to_hbm [thread:$0]  %s874, 256, %s872, %s850, 128, 128, 8
        $region76: #{tpu_custom_call.1} parent=51 // pred_fallthru
          _
        // Predicated region
        $region77: #{tpu_custom_call.1} parent=51 // pred_check
          %p880 = pneg %p257
        $region78: #{tpu_custom_call.1} parent=51 // pred_check_branch
          %882 = sbr.rel (%p880) target = $region80
        $region79: #{tpu_custom_call.1} parent=51 // pred_region
          %s883 = smul.u32 2, %s35
          %s885 = ssub.s32 256, 256
          %886 = vsyncadd %s855, %s885
          %s887 = smul.addr %s883, 128
          %s888 = scalar_lea.hbm %s9, %s887
          %s889 = sshll.u32 %s858, 4
          %s890 = int_to_ptr.vmem [resolvable:$true] %s889
          %895 = dma.vmem_to_hbm [thread:$0]  %s890, 256, %s888, %s855, 128, 128, 8
        $region80: #{tpu_custom_call.1} parent=51 // pred_fallthru
          _
        // Predicated region
        $region81: #{tpu_custom_call.1} parent=51 // pred_check
          %p896 = pneg %p283
        $region82: #{tpu_custom_call.1} parent=51 // pred_check_branch
          %898 = sbr.rel (%p896) target = $region84
        $region83: #{tpu_custom_call.1} parent=51 // pred_region
          %s899 = smul.u32 2, %s35
          %s901 = ssub.s32 256, 256
          %902 = vsyncadd %s860, %s901
          %s903 = smul.addr %s899, 128
          %s904 = scalar_lea.hbm %s10, %s903
          %s905 = sshll.u32 %s863, 4
          %s906 = int_to_ptr.vmem [resolvable:$true] %s905
          %911 = dma.vmem_to_hbm [thread:$0]  %s906, 256, %s904, %s860, 128, 128, 8
        $region84: #{tpu_custom_call.1} parent=51 // pred_fallthru
          _
      $region52: #{tpu_custom_call.1} parent=5 // pred_fallthru
        _
      %p912 = scmp.le.s32.totalorder 2, %s30
      // Predicated region
      $region85: #{tpu_custom_call.1} parent=5 // pred_check
        %p913 = pneg %p912
      $region86: #{tpu_custom_call.1} parent=5 // pred_check_branch
        %915 = sbr.rel (%p913) target = $region88
      $region87: #{tpu_custom_call.1} parent=5 // pred_region
        %s916 = ssub.s32 %s30, 2
        // Predicated region
        $region89: #{tpu_custom_call.1} parent=87 // pred_check
          %p917 = pneg %p237
        $region90: #{tpu_custom_call.1} parent=87 // pred_check_branch
          %919 = sbr.rel (%p917) target = $region92
        $region91: #{tpu_custom_call.1} parent=87 // pred_region
          %s920 = sand.u32 %s222, 1
          %s921 = scalar_lea.sflag [#allocation4], %s920
          %s922 = sand.u32 %s222, 1
          %s923 = smul.addr %s922, 16
          %s924 = scalar_lea.vmem [#allocation11], %s923
          %925 = dma.done %s921, 256
        $region92: #{tpu_custom_call.1} parent=87 // pred_fallthru
          _
        // Predicated region
        $region93: #{tpu_custom_call.1} parent=87 // pred_check
          %p926 = pneg %p263
        $region94: #{tpu_custom_call.1} parent=87 // pred_check_branch
          %928 = sbr.rel (%p926) target = $region96
        $region95: #{tpu_custom_call.1} parent=87 // pred_region
          %s929 = sand.u32 %s36, 1
          %s930 = scalar_lea.sflag [#allocation13], %s929
          %s931 = sand.u32 %s248, 1
          %s932 = smul.addr %s931, 16
          %s933 = scalar_lea.vmem [#allocation12], %s932
          %934 = dma.done %s930, 256
        $region96: #{tpu_custom_call.1} parent=87 // pred_fallthru
          _
        // Predicated region
        $region97: #{tpu_custom_call.1} parent=87 // pred_check
          %p935 = pneg %p289
        $region98: #{tpu_custom_call.1} parent=87 // pred_check_branch
          %937 = sbr.rel (%p935) target = $region100
        $region99: #{tpu_custom_call.1} parent=87 // pred_region
          %s938 = sand.u32 %s36, 1
          %s939 = scalar_lea.sflag [#allocation13], %s938
          %s940 = sand.u32 %s274, 1
          %s941 = smul.addr %s940, 16
          %s942 = scalar_lea.vmem [#allocation14], %s941
          %943 = dma.done %s939, 256
        $region100: #{tpu_custom_call.1} parent=87 // pred_fallthru
          _
      $region88: #{tpu_custom_call.1} parent=5 // pred_fallthru
        _
    $region6: #{tpu_custom_call.1} parent=1 // loop_footer
      %s34 = sadd.s32 1, %s30
    $region7: #{tpu_custom_call.1} parent=1 // loop_footer_branch
      %29 = sbr.rel target = $region3
    $region8: #{tpu_custom_call.1} parent=1 // loop_exit
      _
    %944 = vsyncpa [#allocation3], 1
    %s945 = scalar_lea.sflag [#allocation3], 1
    %946 = vsyncpa %s945, 1
    %947 = vsyncpa [#allocation6], 1
    %s948 = scalar_lea.sflag [#allocation6], 1
    %949 = vsyncpa %s948, 1
    %950 = vsyncpa [#allocation9], 1
    %951 = vsyncpa [#allocation4], 1
    %s952 = scalar_lea.sflag [#allocation4], 1
    %953 = vsyncpa %s952, 1
    %954 = vsyncpa [#allocation13], 1
    %s955 = scalar_lea.sflag [#allocation13], 1
    %956 = vsyncpa %s955, 1

</llo_original>
